<compile_context>
chip_gen: v7x
topology: tpu7x:2x2x1
jax: 0.10.0
libtpu: 0.0.40
codegen_flags: <defaults>
</compile_context>

<pallas_src>
import functools
import math

import numpy as np

import jax
import jax.numpy as jnp
from jax.experimental import pallas as pl
from jax.experimental.pallas import tpu as pltpu


# ---------------------------------------------------------------------------
# Fused kernel: whole AutoEncoder2x forward for ONE sample (grid over batch).
# ---------------------------------------------------------------------------
def _fused_kernel(*refs, layer_cfgs, n_mot, n_body, neg_slope):
    # refs = (x, [w, b] * num_layers, out);   x block: (1, seq, c_in)
    x_ref = refs[0]
    o_ref = refs[-1]
    wb = refs[1:-1]

    def conv(a, li):
        """Conv1d with reflection pad / nearest upsample / stride done by
        static row slicing + concat; single im2col dot (bf16 x bf16 -> f32);
        fused f32 bias + LeakyReLU."""
        K, stride, pad, upsample, act = layer_cfgs[li]
        w_ref, b_ref = wb[2 * li], wb[2 * li + 1]

        T = a.shape[0]
        if upsample:                                   # nearest x2 along time
            rows = []
            for i in range(T):
                r = a[i:i + 1, :]
                rows.append(r)
                rows.append(r)
            a = jnp.concatenate(rows, axis=0)
            T = 2 * T

        # ReflectionPad1d along time (rows): [a[pad],...,a[1]] + a + [a[T-2],...]
        if pad > 0:
            pre = [a[p:p + 1, :] for p in range(pad, 0, -1)]
            post = [a[T - 2 - j:T - 1 - j, :] for j in range(pad)]
            P = jnp.concatenate(pre + [a] + post, axis=0)
        else:
            P = a
        Lp = T + 2 * pad
        t_out = (Lp - K) // stride + 1

        # im2col: column block k holds the rows selected by conv tap k.
        taps = []
        for k in range(K):
            if stride == 1:
                taps.append(P[k:k + t_out, :])
            else:
                taps.append(jnp.concatenate(
                    [P[t * stride + k:t * stride + k + 1, :]
                     for t in range(t_out)], axis=0))
        M = jnp.concatenate(taps, axis=1)              # (t_out, K*Ci), f32

        acc = jnp.dot(M.astype(jnp.bfloat16), w_ref[...],
                      preferred_element_type=jnp.float32)   # one MXU dot/layer
        acc = acc + b_ref[...]                         # bias in f32
        if act:
            acc = jnp.where(acc >= 0.0, acc, neg_slope * acc)   # LeakyReLU(0.2), f32
        return acc

    x = x_ref[0]                                       # (seq, c_in), channels-last

    # --- motion encoder -----------------------------------------------------
    m = x
    li = 0
    for _ in range(n_mot):
        m = conv(m, li)
        li += 1

    # --- static (body) encoder on the first c_in-2 channels ------------------
    bd = x[:, : x.shape[1] - 2]
    for _ in range(n_body):
        bd = conv(bd, li)
        li += 1

    # --- b.repeat(1,1,T_m) (broadcast) and cat([m, b_rep], dim=1) (lane concat)
    t_m = m.shape[0]
    brep = jnp.broadcast_to(bd, (t_m, bd.shape[1]))
    d = jnp.concatenate([m, brep], axis=1)

    # --- decoder (Upsample + ReflectPad + Conv [+ LeakyReLU except last]) ----
    n_dec = len(layer_cfgs) - n_mot - n_body
    for _ in range(n_dec):
        d = conv(d, li)
        li += 1

    o_ref[0] = d.astype(o_ref.dtype)


# ---------------------------------------------------------------------------
# One-time packing / shape bookkeeping.
# ---------------------------------------------------------------------------
def _out_len(t, k, stride, pad, upsample):
    if upsample:
        t *= 2
    assert pad <= t - 1, "ReflectionPad1d requires pad < input length"
    return (t + 2 * pad - k) // stride + 1


def _pack_conv_im2col(w, b):
    """PyTorch Conv1d weight (Co, Ci, K) -> im2col weight (K*Ci, Co) in bf16;
    bias -> (1, Co) in f32.  Row index of the packed weight = k*Ci + ci, which
    matches the column order produced by the in-kernel im2col."""
    co, ci, k = w.shape
    wp = jnp.transpose(jnp.asarray(w, jnp.float32), (2, 1, 0)).reshape(k * ci, co)
    return wp.astype(jnp.bfloat16), jnp.asarray(b, jnp.float32).reshape(1, co)


def make_autoencoder2x(params, x_shape, *, neg_slope=0.2):
    """Pre-packs parameters for a fixed input shape (n, c_in, seq) and returns
    a forward(x_ncl) that runs a single fused Pallas kernel (grid over batch)."""
    n, c_in, seq = x_shape
    mot, body, dec = params["mot"], params["body"], params["dec"]

    c_mot = mot[-1][0].shape[0]
    c_body = body[-1][0].shape[0]
    c_out = dec[-1][0].shape[0]
    assert mot[0][0].shape[1] == c_in and body[0][0].shape[1] == c_in - 2
    assert dec[0][0].shape[1] == c_mot + c_body and c_out == mot[0][0].shape[1]

    packed = []
    layer_cfgs = []

    t = seq
    for (w, b) in mot:                                 # Encoder(kernel=8, s=2)
        K = w.shape[2]
        pad = (K - 2) // 2
        layer_cfgs.append((K, 2, pad, False, True))
        packed += list(_pack_conv_im2col(w, b))
        t = _out_len(t, K, 2, pad, False)
    t_m = t

    t = seq
    for (w, b) in body:                                # Encoder(kernel=7, s=2)
        K = w.shape[2]
        pad = (K - 2) // 2
        layer_cfgs.append((K, 2, pad, False, True))
        packed += list(_pack_conv_im2col(w, b))
        t = _out_len(t, K, 2, pad, False)
    t_b = t
    # torch cat([m, b.repeat(1,1,m.shape[-1])], dim=1) needs body-code length 1
    assert t_b == 1, "body-encoder output length must be 1 for repeat/cat"

    t = t_m
    for i, (w, b) in enumerate(dec):                   # Decoder(kernel=7, up x2)
        K = w.shape[2]
        pad = (K - 1) // 2
        layer_cfgs.append((K, 1, pad, True, i != len(dec) - 1))
        packed += list(_pack_conv_im2col(w, b))
        t = _out_len(t, K, 1, pad, True)
    l_out = t

    packed = tuple(packed)

    kernel = functools.partial(_fused_kernel,
                               layer_cfgs=tuple(layer_cfgs),
                               n_mot=len(mot), n_body=len(body),
                               neg_slope=neg_slope)

    in_specs = [pl.BlockSpec((1, seq, c_in), lambda b: (b, 0, 0))]
    for arr in packed:                                  # weights/biases: whole-array
        in_specs.append(pl.BlockSpec(arr.shape, lambda b: (0, 0)))

    fused_call = pl.pallas_call(
        kernel,
        out_shape=jax.ShapeDtypeStruct((n, l_out, c_out), jnp.float32),
        grid=(n,),
        in_specs=in_specs,
        out_specs=pl.BlockSpec((1, l_out, c_out), lambda b: (b, 0, 0)),
        compiler_params=pltpu.CompilerParams(
            dimension_semantics=("parallel",)),
    )

    @jax.jit
    def forward(x_ncl):
        # NCL -> NLC channels-last (layout plumbing only), run kernel, back to NCL.
        x_nlc = jnp.transpose(x_ncl.astype(jnp.float32), (0, 2, 1))
        y_nlc = fused_call(x_nlc, *packed)
        return jnp.transpose(y_nlc, (0, 2, 1))

    def apply(x_ncl):
        if tuple(x_ncl.shape) != (n, c_in, seq):
            raise ValueError(f"packed for input shape {(n, c_in, seq)}, "
                             f"got {tuple(x_ncl.shape)}")
        return forward(x_ncl)

    return apply


# ---------------------------------------------------------------------------
# Deterministic parameter init (matches PyTorch Conv1d default U(+-1/sqrt(fan)))
# ---------------------------------------------------------------------------
def _init_conv(key, c_in, c_out, k):
    kw, kb = jax.random.split(key)
    bound = 1.0 / math.sqrt(c_in * k)
    w = jax.random.uniform(kw, (c_out, c_in, k), jnp.float32, -bound, bound)
    b = jax.random.uniform(kb, (c_out,), jnp.float32, -bound, bound)
    return w, b


# ---------------------------------------------------------------------------
# Pure-numpy reference (direct port of the PyTorch forward) for validation.
# ---------------------------------------------------------------------------
def _np_conv1d_reflect(x_nlc, w, b, stride, pad):
    xp = np.pad(x_nlc, ((0, 0), (pad, pad), (0, 0)), mode="reflect")
    _, lp, _ = xp.shape
    co, _, k = w.shape
    t_out = (lp - k) // stride + 1
    out = np.zeros((xp.shape[0], t_out, co), np.float32)
    for t in range(t_out):
        seg = xp[:, t * stride:t * stride + k, :]          # (N, K, Ci)
        out[:, t, :] = np.einsum("nkc,ock->no", seg, w) + b
    return out


def _np_leaky(x, s=0.2):
    return np.where(x >= 0, x, s * x)


def np_reference(params, x_ncl, mot_k=8, body_k=7, dec_k=7):
    x = np.transpose(np.asarray(x_ncl), (0, 2, 1)).astype(np.float32)
    m = x
    for (w, b) in params["mot"]:
        m = _np_leaky(_np_conv1d_reflect(m, np.asarray(w), np.asarray(b), 2,
                                         (mot_k - 2) // 2))
    bd = x[:, :, :-2]
    for (w, b) in params["body"]:
        bd = _np_leaky(_np_conv1d_reflect(bd, np.asarray(w), np.asarray(b), 2,
                                          (body_k - 2) // 2))
    d = np.concatenate([m, np.tile(bd, (1, m.shape[1], 1))], axis=2)
    for i, (w, b) in enumerate(params["dec"]):
        d = np.repeat(d, 2, axis=1)                        # Upsample(2,'nearest')
        d = _np_conv1d_reflect(d, np.asarray(w), np.asarray(b), 1,
                               (dec_k - 1) // 2)
        if i != len(params["dec"]) - 1:
            d = _np_leaky(d)
    return np.transpose(d, (0, 2, 1))


if __name__ == "__main__":
    MOT_EN = (6, 16, 24)      # mot_en_channels
    BODY_EN = (4, 16, 8)      # body_en_channels (= mot input channels - 2)
    DE = (32, 16, 6)          # de_channels
    assert MOT_EN[0] == DE[-1] and MOT_EN[-1] + BODY_EN[-1] == DE[0]
    assert BODY_EN[0] == MOT_EN[0] - 2

    root = jax.random.PRNGKey(0)
    keys = iter(jax.random.split(root, 16))
    params = {
        "mot": [_init_conv(next(keys), MOT_EN[i], MOT_EN[i + 1], 8)
                for i in range(len(MOT_EN) - 1)],
        "body": [_init_conv(next(keys), BODY_EN[i], BODY_EN[i + 1], 7)
                 for i in range(len(BODY_EN) - 1)],
        "dec": [_init_conv(next(keys), DE[i], DE[i + 1], 7)
                for i in range(len(DE) - 1)],
    }

    # Input in PyTorch NCL layout: (batch=2, channels=6, seq_len=8)
    x = jax.random.normal(jax.random.PRNGKey(0), (2, MOT_EN[0], 8), jnp.float32)

    forward = make_autoencoder2x(params, x.shape)
    out = jax.block_until_ready(forward(x))
    assert out.shape == (2, DE[-1], 8), out.shape

    ref = np_reference(params, x)
    # bf16 dot operands with f32 accumulation: small, well-bounded rounding.
    np.testing.assert_allclose(np.asarray(out), ref, rtol=3e-2, atol=3e-2)
    print("KERNEL_OK")
</pallas_src>

<mosaic_0001>
module attributes {stable_mosaic.version = 11 : i64} {
  func.func @_fused_kernel(%arg0: i32, %arg1: memref<1x8x6xf32, #tpu.memory_space<vmem>>, %arg2: memref<48x16xbf16, #tpu.memory_space<vmem>>, %arg3: memref<1x16xf32, #tpu.memory_space<vmem>>, %arg4: memref<128x24xbf16, #tpu.memory_space<vmem>>, %arg5: memref<1x24xf32, #tpu.memory_space<vmem>>, %arg6: memref<28x16xbf16, #tpu.memory_space<vmem>>, %arg7: memref<1x16xf32, #tpu.memory_space<vmem>>, %arg8: memref<112x8xbf16, #tpu.memory_space<vmem>>, %arg9: memref<1x8xf32, #tpu.memory_space<vmem>>, %arg10: memref<224x16xbf16, #tpu.memory_space<vmem>>, %arg11: memref<1x16xf32, #tpu.memory_space<vmem>>, %arg12: memref<112x6xbf16, #tpu.memory_space<vmem>>, %arg13: memref<1x6xf32, #tpu.memory_space<vmem>>, %arg14: memref<1x8x6xf32, #tpu.memory_space<vmem>>) attributes {dimension_semantics = [#tpu.dimension_semantics<parallel>], iteration_bounds = array<i64: 2>, scalar_prefetch = 0 : i64, scratch_operands = 0 : i64, tpu.core_type = #tpu.core_type<tc>, window_params = [{transform_indices = @transform_0, window_bounds = array<i64: 1, 8, 6>}, {pipeline_mode = #tpu.pipeline_mode<synchronous>, transform_indices = @transform_1, window_bounds = array<i64: 48, 16>}, {pipeline_mode = #tpu.pipeline_mode<synchronous>, transform_indices = @transform_2, window_bounds = array<i64: 1, 16>}, {pipeline_mode = #tpu.pipeline_mode<synchronous>, transform_indices = @transform_3, window_bounds = array<i64: 128, 24>}, {pipeline_mode = #tpu.pipeline_mode<synchronous>, transform_indices = @transform_4, window_bounds = array<i64: 1, 24>}, {pipeline_mode = #tpu.pipeline_mode<synchronous>, transform_indices = @transform_5, window_bounds = array<i64: 28, 16>}, {pipeline_mode = #tpu.pipeline_mode<synchronous>, transform_indices = @transform_6, window_bounds = array<i64: 1, 16>}, {pipeline_mode = #tpu.pipeline_mode<synchronous>, transform_indices = @transform_7, window_bounds = array<i64: 112, 8>}, {pipeline_mode = #tpu.pipeline_mode<synchronous>, transform_indices = @transform_8, window_bounds = array<i64: 1, 8>}, {pipeline_mode = #tpu.pipeline_mode<synchronous>, transform_indices = @transform_9, window_bounds = array<i64: 224, 16>}, {pipeline_mode = #tpu.pipeline_mode<synchronous>, transform_indices = @transform_10, window_bounds = array<i64: 1, 16>}, {pipeline_mode = #tpu.pipeline_mode<synchronous>, transform_indices = @transform_11, window_bounds = array<i64: 112, 6>}, {pipeline_mode = #tpu.pipeline_mode<synchronous>, transform_indices = @transform_12, window_bounds = array<i64: 1, 6>}, {transform_indices = @transform_13, window_bounds = array<i64: 1, 8, 6>}]} {
    %c0 = arith.constant 0 : index
    %c0_0 = arith.constant 0 : index
    %c0_1 = arith.constant 0 : index
    %0 = vector.load %arg1[%c0, %c0_0, %c0_1] : memref<1x8x6xf32, #tpu.memory_space<vmem>>, vector<1x8x6xf32>
    %1 = vector.shape_cast %0 : vector<1x8x6xf32> to vector<8x6xf32>
    %2 = vector.extract_strided_slice %1 {offsets = [3, 0], sizes = [1, 6], strides = [1, 1]} : vector<8x6xf32> to vector<1x6xf32>
    %3 = vector.extract_strided_slice %1 {offsets = [2, 0], sizes = [1, 6], strides = [1, 1]} : vector<8x6xf32> to vector<1x6xf32>
    %4 = vector.extract_strided_slice %1 {offsets = [1, 0], sizes = [1, 6], strides = [1, 1]} : vector<8x6xf32> to vector<1x6xf32>
    %5 = vector.extract_strided_slice %1 {offsets = [6, 0], sizes = [1, 6], strides = [1, 1]} : vector<8x6xf32> to vector<1x6xf32>
    %6 = vector.extract_strided_slice %1 {offsets = [5, 0], sizes = [1, 6], strides = [1, 1]} : vector<8x6xf32> to vector<1x6xf32>
    %7 = vector.extract_strided_slice %1 {offsets = [4, 0], sizes = [1, 6], strides = [1, 1]} : vector<8x6xf32> to vector<1x6xf32>
    %8 = tpu.concatenate %2, %3, %4, %1, %5, %6, %7 in 0 : vector<1x6xf32>, vector<1x6xf32>, vector<1x6xf32>, vector<8x6xf32>, vector<1x6xf32>, vector<1x6xf32>, vector<1x6xf32> -> vector<14x6xf32>
    %9 = vector.extract_strided_slice %8 {offsets = [0, 0], sizes = [1, 6], strides = [1, 1]} : vector<14x6xf32> to vector<1x6xf32>
    %10 = vector.extract_strided_slice %8 {offsets = [2, 0], sizes = [1, 6], strides = [1, 1]} : vector<14x6xf32> to vector<1x6xf32>
    %11 = vector.extract_strided_slice %8 {offsets = [4, 0], sizes = [1, 6], strides = [1, 1]} : vector<14x6xf32> to vector<1x6xf32>
    %12 = vector.extract_strided_slice %8 {offsets = [6, 0], sizes = [1, 6], strides = [1, 1]} : vector<14x6xf32> to vector<1x6xf32>
    %13 = tpu.concatenate %9, %10, %11, %12 in 0 : vector<1x6xf32>, vector<1x6xf32>, vector<1x6xf32>, vector<1x6xf32> -> vector<4x6xf32>
    %14 = vector.extract_strided_slice %8 {offsets = [1, 0], sizes = [1, 6], strides = [1, 1]} : vector<14x6xf32> to vector<1x6xf32>
    %15 = vector.extract_strided_slice %8 {offsets = [3, 0], sizes = [1, 6], strides = [1, 1]} : vector<14x6xf32> to vector<1x6xf32>
    %16 = vector.extract_strided_slice %8 {offsets = [5, 0], sizes = [1, 6], strides = [1, 1]} : vector<14x6xf32> to vector<1x6xf32>
    %17 = vector.extract_strided_slice %8 {offsets = [7, 0], sizes = [1, 6], strides = [1, 1]} : vector<14x6xf32> to vector<1x6xf32>
    %18 = tpu.concatenate %14, %15, %16, %17 in 0 : vector<1x6xf32>, vector<1x6xf32>, vector<1x6xf32>, vector<1x6xf32> -> vector<4x6xf32>
    %19 = vector.extract_strided_slice %8 {offsets = [2, 0], sizes = [1, 6], strides = [1, 1]} : vector<14x6xf32> to vector<1x6xf32>
    %20 = vector.extract_strided_slice %8 {offsets = [4, 0], sizes = [1, 6], strides = [1, 1]} : vector<14x6xf32> to vector<1x6xf32>
    %21 = vector.extract_strided_slice %8 {offsets = [6, 0], sizes = [1, 6], strides = [1, 1]} : vector<14x6xf32> to vector<1x6xf32>
    %22 = vector.extract_strided_slice %8 {offsets = [8, 0], sizes = [1, 6], strides = [1, 1]} : vector<14x6xf32> to vector<1x6xf32>
    %23 = tpu.concatenate %19, %20, %21, %22 in 0 : vector<1x6xf32>, vector<1x6xf32>, vector<1x6xf32>, vector<1x6xf32> -> vector<4x6xf32>
    %24 = vector.extract_strided_slice %8 {offsets = [3, 0], sizes = [1, 6], strides = [1, 1]} : vector<14x6xf32> to vector<1x6xf32>
    %25 = vector.extract_strided_slice %8 {offsets = [5, 0], sizes = [1, 6], strides = [1, 1]} : vector<14x6xf32> to vector<1x6xf32>
    %26 = vector.extract_strided_slice %8 {offsets = [7, 0], sizes = [1, 6], strides = [1, 1]} : vector<14x6xf32> to vector<1x6xf32>
    %27 = vector.extract_strided_slice %8 {offsets = [9, 0], sizes = [1, 6], strides = [1, 1]} : vector<14x6xf32> to vector<1x6xf32>
    %28 = tpu.concatenate %24, %25, %26, %27 in 0 : vector<1x6xf32>, vector<1x6xf32>, vector<1x6xf32>, vector<1x6xf32> -> vector<4x6xf32>
    %29 = vector.extract_strided_slice %8 {offsets = [4, 0], sizes = [1, 6], strides = [1, 1]} : vector<14x6xf32> to vector<1x6xf32>
    %30 = vector.extract_strided_slice %8 {offsets = [6, 0], sizes = [1, 6], strides = [1, 1]} : vector<14x6xf32> to vector<1x6xf32>
    %31 = vector.extract_strided_slice %8 {offsets = [8, 0], sizes = [1, 6], strides = [1, 1]} : vector<14x6xf32> to vector<1x6xf32>
    %32 = vector.extract_strided_slice %8 {offsets = [10, 0], sizes = [1, 6], strides = [1, 1]} : vector<14x6xf32> to vector<1x6xf32>
    %33 = tpu.concatenate %29, %30, %31, %32 in 0 : vector<1x6xf32>, vector<1x6xf32>, vector<1x6xf32>, vector<1x6xf32> -> vector<4x6xf32>
    %34 = vector.extract_strided_slice %8 {offsets = [5, 0], sizes = [1, 6], strides = [1, 1]} : vector<14x6xf32> to vector<1x6xf32>
    %35 = vector.extract_strided_slice %8 {offsets = [7, 0], sizes = [1, 6], strides = [1, 1]} : vector<14x6xf32> to vector<1x6xf32>
    %36 = vector.extract_strided_slice %8 {offsets = [9, 0], sizes = [1, 6], strides = [1, 1]} : vector<14x6xf32> to vector<1x6xf32>
    %37 = vector.extract_strided_slice %8 {offsets = [11, 0], sizes = [1, 6], strides = [1, 1]} : vector<14x6xf32> to vector<1x6xf32>
    %38 = tpu.concatenate %34, %35, %36, %37 in 0 : vector<1x6xf32>, vector<1x6xf32>, vector<1x6xf32>, vector<1x6xf32> -> vector<4x6xf32>
    %39 = vector.extract_strided_slice %8 {offsets = [6, 0], sizes = [1, 6], strides = [1, 1]} : vector<14x6xf32> to vector<1x6xf32>
    %40 = vector.extract_strided_slice %8 {offsets = [8, 0], sizes = [1, 6], strides = [1, 1]} : vector<14x6xf32> to vector<1x6xf32>
    %41 = vector.extract_strided_slice %8 {offsets = [10, 0], sizes = [1, 6], strides = [1, 1]} : vector<14x6xf32> to vector<1x6xf32>
    %42 = vector.extract_strided_slice %8 {offsets = [12, 0], sizes = [1, 6], strides = [1, 1]} : vector<14x6xf32> to vector<1x6xf32>
    %43 = tpu.concatenate %39, %40, %41, %42 in 0 : vector<1x6xf32>, vector<1x6xf32>, vector<1x6xf32>, vector<1x6xf32> -> vector<4x6xf32>
    %44 = vector.extract_strided_slice %8 {offsets = [7, 0], sizes = [1, 6], strides = [1, 1]} : vector<14x6xf32> to vector<1x6xf32>
    %45 = vector.extract_strided_slice %8 {offsets = [9, 0], sizes = [1, 6], strides = [1, 1]} : vector<14x6xf32> to vector<1x6xf32>
    %46 = vector.extract_strided_slice %8 {offsets = [11, 0], sizes = [1, 6], strides = [1, 1]} : vector<14x6xf32> to vector<1x6xf32>
    %47 = vector.extract_strided_slice %8 {offsets = [13, 0], sizes = [1, 6], strides = [1, 1]} : vector<14x6xf32> to vector<1x6xf32>
    %48 = tpu.concatenate %44, %45, %46, %47 in 0 : vector<1x6xf32>, vector<1x6xf32>, vector<1x6xf32>, vector<1x6xf32> -> vector<4x6xf32>
    %49 = tpu.concatenate %13, %18, %23, %28, %33, %38, %43, %48 in 1 : vector<4x6xf32>, vector<4x6xf32>, vector<4x6xf32>, vector<4x6xf32>, vector<4x6xf32>, vector<4x6xf32>, vector<4x6xf32>, vector<4x6xf32> -> vector<4x48xf32>
    %50 = arith.truncf %49 : vector<4x48xf32> to vector<4x48xbf16>
    %c0_2 = arith.constant 0 : index
    %c0_3 = arith.constant 0 : index
    %51 = vector.load %arg2[%c0_2, %c0_3] : memref<48x16xbf16, #tpu.memory_space<vmem>>, vector<48x16xbf16>
    %cst = arith.constant dense<0.000000e+00> : vector<4x16xf32>
    %52 = tpu.matmul %50, %51, %cst {dimension_numbers = #tpu.dot_dimension_numbers<[1], [0], [0], [1], [0, 0, 1, 1], [], []>} : vector<4x48xbf16>, vector<48x16xbf16>, vector<4x16xf32> -> vector<4x16xf32>
    %c0_4 = arith.constant 0 : index
    %c0_5 = arith.constant 0 : index
    %53 = vector.load %arg3[%c0_4, %c0_5] : memref<1x16xf32, #tpu.memory_space<vmem>>, vector<1x16xf32>
    %54 = vector.broadcast %53 : vector<1x16xf32> to vector<4x16xf32>
    %55 = arith.addf %52, %54 : vector<4x16xf32>
    %cst_6 = arith.constant 0.000000e+00 : f32
    %56 = vector.broadcast %cst_6 : f32 to vector<4x16xf32>
    %57 = arith.cmpf oge, %55, %56 : vector<4x16xf32>
    %cst_7 = arith.constant 2.000000e-01 : f32
    %58 = vector.broadcast %cst_7 : f32 to vector<4x16xf32>
    %59 = arith.mulf %58, %55 : vector<4x16xf32>
    %60 = arith.select %57, %55, %59 : vector<4x16xi1>, vector<4x16xf32>
    %61 = vector.extract_strided_slice %60 {offsets = [3, 0], sizes = [1, 16], strides = [1, 1]} : vector<4x16xf32> to vector<1x16xf32>
    %62 = vector.extract_strided_slice %60 {offsets = [2, 0], sizes = [1, 16], strides = [1, 1]} : vector<4x16xf32> to vector<1x16xf32>
    %63 = vector.extract_strided_slice %60 {offsets = [1, 0], sizes = [1, 16], strides = [1, 1]} : vector<4x16xf32> to vector<1x16xf32>
    %64 = vector.extract_strided_slice %60 {offsets = [2, 0], sizes = [1, 16], strides = [1, 1]} : vector<4x16xf32> to vector<1x16xf32>
    %65 = vector.extract_strided_slice %60 {offsets = [1, 0], sizes = [1, 16], strides = [1, 1]} : vector<4x16xf32> to vector<1x16xf32>
    %66 = vector.extract_strided_slice %60 {offsets = [0, 0], sizes = [1, 16], strides = [1, 1]} : vector<4x16xf32> to vector<1x16xf32>
    %67 = tpu.concatenate %61, %62, %63, %60, %64, %65, %66 in 0 : vector<1x16xf32>, vector<1x16xf32>, vector<1x16xf32>, vector<4x16xf32>, vector<1x16xf32>, vector<1x16xf32>, vector<1x16xf32> -> vector<10x16xf32>
    %68 = vector.extract_strided_slice %67 {offsets = [0, 0], sizes = [1, 16], strides = [1, 1]} : vector<10x16xf32> to vector<1x16xf32>
    %69 = vector.extract_strided_slice %67 {offsets = [2, 0], sizes = [1, 16], strides = [1, 1]} : vector<10x16xf32> to vector<1x16xf32>
    %70 = tpu.concatenate %68, %69 in 0 : vector<1x16xf32>, vector<1x16xf32> -> vector<2x16xf32>
    %71 = vector.extract_strided_slice %67 {offsets = [1, 0], sizes = [1, 16], strides = [1, 1]} : vector<10x16xf32> to vector<1x16xf32>
    %72 = vector.extract_strided_slice %67 {offsets = [3, 0], sizes = [1, 16], strides = [1, 1]} : vector<10x16xf32> to vector<1x16xf32>
    %73 = tpu.concatenate %71, %72 in 0 : vector<1x16xf32>, vector<1x16xf32> -> vector<2x16xf32>
    %74 = vector.extract_strided_slice %67 {offsets = [2, 0], sizes = [1, 16], strides = [1, 1]} : vector<10x16xf32> to vector<1x16xf32>
    %75 = vector.extract_strided_slice %67 {offsets = [4, 0], sizes = [1, 16], strides = [1, 1]} : vector<10x16xf32> to vector<1x16xf32>
    %76 = tpu.concatenate %74, %75 in 0 : vector<1x16xf32>, vector<1x16xf32> -> vector<2x16xf32>
    %77 = vector.extract_strided_slice %67 {offsets = [3, 0], sizes = [1, 16], strides = [1, 1]} : vector<10x16xf32> to vector<1x16xf32>
    %78 = vector.extract_strided_slice %67 {offsets = [5, 0], sizes = [1, 16], strides = [1, 1]} : vector<10x16xf32> to vector<1x16xf32>
    %79 = tpu.concatenate %77, %78 in 0 : vector<1x16xf32>, vector<1x16xf32> -> vector<2x16xf32>
    %80 = vector.extract_strided_slice %67 {offsets = [4, 0], sizes = [1, 16], strides = [1, 1]} : vector<10x16xf32> to vector<1x16xf32>
    %81 = vector.extract_strided_slice %67 {offsets = [6, 0], sizes = [1, 16], strides = [1, 1]} : vector<10x16xf32> to vector<1x16xf32>
    %82 = tpu.concatenate %80, %81 in 0 : vector<1x16xf32>, vector<1x16xf32> -> vector<2x16xf32>
    %83 = vector.extract_strided_slice %67 {offsets = [5, 0], sizes = [1, 16], strides = [1, 1]} : vector<10x16xf32> to vector<1x16xf32>
    %84 = vector.extract_strided_slice %67 {offsets = [7, 0], sizes = [1, 16], strides = [1, 1]} : vector<10x16xf32> to vector<1x16xf32>
    %85 = tpu.concatenate %83, %84 in 0 : vector<1x16xf32>, vector<1x16xf32> -> vector<2x16xf32>
    %86 = vector.extract_strided_slice %67 {offsets = [6, 0], sizes = [1, 16], strides = [1, 1]} : vector<10x16xf32> to vector<1x16xf32>
    %87 = vector.extract_strided_slice %67 {offsets = [8, 0], sizes = [1, 16], strides = [1, 1]} : vector<10x16xf32> to vector<1x16xf32>
    %88 = tpu.concatenate %86, %87 in 0 : vector<1x16xf32>, vector<1x16xf32> -> vector<2x16xf32>
    %89 = vector.extract_strided_slice %67 {offsets = [7, 0], sizes = [1, 16], strides = [1, 1]} : vector<10x16xf32> to vector<1x16xf32>
    %90 = vector.extract_strided_slice %67 {offsets = [9, 0], sizes = [1, 16], strides = [1, 1]} : vector<10x16xf32> to vector<1x16xf32>
    %91 = tpu.concatenate %89, %90 in 0 : vector<1x16xf32>, vector<1x16xf32> -> vector<2x16xf32>
    %92 = tpu.concatenate %70, %73, %76, %79, %82, %85, %88, %91 in 1 : vector<2x16xf32>, vector<2x16xf32>, vector<2x16xf32>, vector<2x16xf32>, vector<2x16xf32>, vector<2x16xf32>, vector<2x16xf32>, vector<2x16xf32> -> vector<2x128xf32>
    %93 = arith.truncf %92 : vector<2x128xf32> to vector<2x128xbf16>
    %c0_8 = arith.constant 0 : index
    %c0_9 = arith.constant 0 : index
    %94 = vector.load %arg4[%c0_8, %c0_9] : memref<128x24xbf16, #tpu.memory_space<vmem>>, vector<128x24xbf16>
    %cst_10 = arith.constant dense<0.000000e+00> : vector<2x24xf32>
    %95 = tpu.matmul %93, %94, %cst_10 {dimension_numbers = #tpu.dot_dimension_numbers<[1], [0], [0], [1], [0, 0, 1, 1], [], []>} : vector<2x128xbf16>, vector<128x24xbf16>, vector<2x24xf32> -> vector<2x24xf32>
    %c0_11 = arith.constant 0 : index
    %c0_12 = arith.constant 0 : index
    %96 = vector.load %arg5[%c0_11, %c0_12] : memref<1x24xf32, #tpu.memory_space<vmem>>, vector<1x24xf32>
    %97 = vector.broadcast %96 : vector<1x24xf32> to vector<2x24xf32>
    %98 = arith.addf %95, %97 : vector<2x24xf32>
    %cst_13 = arith.constant 0.000000e+00 : f32
    %99 = vector.broadcast %cst_13 : f32 to vector<2x24xf32>
    %100 = arith.cmpf oge, %98, %99 : vector<2x24xf32>
    %cst_14 = arith.constant 2.000000e-01 : f32
    %101 = vector.broadcast %cst_14 : f32 to vector<2x24xf32>
    %102 = arith.mulf %101, %98 : vector<2x24xf32>
    %103 = arith.select %100, %98, %102 : vector<2x24xi1>, vector<2x24xf32>
    %104 = vector.extract_strided_slice %1 {offsets = [0, 0], sizes = [8, 4], strides = [1, 1]} : vector<8x6xf32> to vector<8x4xf32>
    %105 = vector.extract_strided_slice %104 {offsets = [2, 0], sizes = [1, 4], strides = [1, 1]} : vector<8x4xf32> to vector<1x4xf32>
    %106 = vector.extract_strided_slice %104 {offsets = [1, 0], sizes = [1, 4], strides = [1, 1]} : vector<8x4xf32> to vector<1x4xf32>
    %107 = vector.extract_strided_slice %104 {offsets = [6, 0], sizes = [1, 4], strides = [1, 1]} : vector<8x4xf32> to vector<1x4xf32>
    %108 = vector.extract_strided_slice %104 {offsets = [5, 0], sizes = [1, 4], strides = [1, 1]} : vector<8x4xf32> to vector<1x4xf32>
    %109 = tpu.concatenate %105, %106, %104, %107, %108 in 0 : vector<1x4xf32>, vector<1x4xf32>, vector<8x4xf32>, vector<1x4xf32>, vector<1x4xf32> -> vector<12x4xf32>
    %110 = vector.extract_strided_slice %109 {offsets = [0, 0], sizes = [1, 4], strides = [1, 1]} : vector<12x4xf32> to vector<1x4xf32>
    %111 = vector.extract_strided_slice %109 {offsets = [2, 0], sizes = [1, 4], strides = [1, 1]} : vector<12x4xf32> to vector<1x4xf32>
    %112 = vector.extract_strided_slice %109 {offsets = [4, 0], sizes = [1, 4], strides = [1, 1]} : vector<12x4xf32> to vector<1x4xf32>
    %113 = tpu.concatenate %110, %111, %112 in 0 : vector<1x4xf32>, vector<1x4xf32>, vector<1x4xf32> -> vector<3x4xf32>
    %114 = vector.extract_strided_slice %109 {offsets = [1, 0], sizes = [1, 4], strides = [1, 1]} : vector<12x4xf32> to vector<1x4xf32>
    %115 = vector.extract_strided_slice %109 {offsets = [3, 0], sizes = [1, 4], strides = [1, 1]} : vector<12x4xf32> to vector<1x4xf32>
    %116 = vector.extract_strided_slice %109 {offsets = [5, 0], sizes = [1, 4], strides = [1, 1]} : vector<12x4xf32> to vector<1x4xf32>
    %117 = tpu.concatenate %114, %115, %116 in 0 : vector<1x4xf32>, vector<1x4xf32>, vector<1x4xf32> -> vector<3x4xf32>
    %118 = vector.extract_strided_slice %109 {offsets = [2, 0], sizes = [1, 4], strides = [1, 1]} : vector<12x4xf32> to vector<1x4xf32>
    %119 = vector.extract_strided_slice %109 {offsets = [4, 0], sizes = [1, 4], strides = [1, 1]} : vector<12x4xf32> to vector<1x4xf32>
    %120 = vector.extract_strided_slice %109 {offsets = [6, 0], sizes = [1, 4], strides = [1, 1]} : vector<12x4xf32> to vector<1x4xf32>
    %121 = tpu.concatenate %118, %119, %120 in 0 : vector<1x4xf32>, vector<1x4xf32>, vector<1x4xf32> -> vector<3x4xf32>
    %122 = vector.extract_strided_slice %109 {offsets = [3, 0], sizes = [1, 4], strides = [1, 1]} : vector<12x4xf32> to vector<1x4xf32>
    %123 = vector.extract_strided_slice %109 {offsets = [5, 0], sizes = [1, 4], strides = [1, 1]} : vector<12x4xf32> to vector<1x4xf32>
    %124 = vector.extract_strided_slice %109 {offsets = [7, 0], sizes = [1, 4], strides = [1, 1]} : vector<12x4xf32> to vector<1x4xf32>
    %125 = tpu.concatenate %122, %123, %124 in 0 : vector<1x4xf32>, vector<1x4xf32>, vector<1x4xf32> -> vector<3x4xf32>
    %126 = vector.extract_strided_slice %109 {offsets = [4, 0], sizes = [1, 4], strides = [1, 1]} : vector<12x4xf32> to vector<1x4xf32>
    %127 = vector.extract_strided_slice %109 {offsets = [6, 0], sizes = [1, 4], strides = [1, 1]} : vector<12x4xf32> to vector<1x4xf32>
    %128 = vector.extract_strided_slice %109 {offsets = [8, 0], sizes = [1, 4], strides = [1, 1]} : vector<12x4xf32> to vector<1x4xf32>
    %129 = tpu.concatenate %126, %127, %128 in 0 : vector<1x4xf32>, vector<1x4xf32>, vector<1x4xf32> -> vector<3x4xf32>
    %130 = vector.extract_strided_slice %109 {offsets = [5, 0], sizes = [1, 4], strides = [1, 1]} : vector<12x4xf32> to vector<1x4xf32>
    %131 = vector.extract_strided_slice %109 {offsets = [7, 0], sizes = [1, 4], strides = [1, 1]} : vector<12x4xf32> to vector<1x4xf32>
    %132 = vector.extract_strided_slice %109 {offsets = [9, 0], sizes = [1, 4], strides = [1, 1]} : vector<12x4xf32> to vector<1x4xf32>
    %133 = tpu.concatenate %130, %131, %132 in 0 : vector<1x4xf32>, vector<1x4xf32>, vector<1x4xf32> -> vector<3x4xf32>
    %134 = vector.extract_strided_slice %109 {offsets = [6, 0], sizes = [1, 4], strides = [1, 1]} : vector<12x4xf32> to vector<1x4xf32>
    %135 = vector.extract_strided_slice %109 {offsets = [8, 0], sizes = [1, 4], strides = [1, 1]} : vector<12x4xf32> to vector<1x4xf32>
    %136 = vector.extract_strided_slice %109 {offsets = [10, 0], sizes = [1, 4], strides = [1, 1]} : vector<12x4xf32> to vector<1x4xf32>
    %137 = tpu.concatenate %134, %135, %136 in 0 : vector<1x4xf32>, vector<1x4xf32>, vector<1x4xf32> -> vector<3x4xf32>
    %138 = tpu.concatenate %113, %117, %121, %125, %129, %133, %137 in 1 : vector<3x4xf32>, vector<3x4xf32>, vector<3x4xf32>, vector<3x4xf32>, vector<3x4xf32>, vector<3x4xf32>, vector<3x4xf32> -> vector<3x28xf32>
    %139 = arith.truncf %138 : vector<3x28xf32> to vector<3x28xbf16>
    %c0_15 = arith.constant 0 : index
    %c0_16 = arith.constant 0 : index
    %140 = vector.load %arg6[%c0_15, %c0_16] : memref<28x16xbf16, #tpu.memory_space<vmem>>, vector<28x16xbf16>
    %cst_17 = arith.constant dense<0.000000e+00> : vector<3x16xf32>
    %141 = tpu.matmul %139, %140, %cst_17 {dimension_numbers = #tpu.dot_dimension_numbers<[1], [0], [0], [1], [0, 0, 1, 1], [], []>} : vector<3x28xbf16>, vector<28x16xbf16>, vector<3x16xf32> -> vector<3x16xf32>
    %c0_18 = arith.constant 0 : index
    %c0_19 = arith.constant 0 : index
    %142 = vector.load %arg7[%c0_18, %c0_19] : memref<1x16xf32, #tpu.memory_space<vmem>>, vector<1x16xf32>
    %143 = vector.broadcast %142 : vector<1x16xf32> to vector<3x16xf32>
    %144 = arith.addf %141, %143 : vector<3x16xf32>
    %cst_20 = arith.constant 0.000000e+00 : f32
    %145 = vector.broadcast %cst_20 : f32 to vector<3x16xf32>
    %146 = arith.cmpf oge, %144, %145 : vector<3x16xf32>
    %cst_21 = arith.constant 2.000000e-01 : f32
    %147 = vector.broadcast %cst_21 : f32 to vector<3x16xf32>
    %148 = arith.mulf %147, %144 : vector<3x16xf32>
    %149 = arith.select %146, %144, %148 : vector<3x16xi1>, vector<3x16xf32>
    %150 = vector.extract_strided_slice %149 {offsets = [2, 0], sizes = [1, 16], strides = [1, 1]} : vector<3x16xf32> to vector<1x16xf32>
    %151 = vector.extract_strided_slice %149 {offsets = [1, 0], sizes = [1, 16], strides = [1, 1]} : vector<3x16xf32> to vector<1x16xf32>
    %152 = vector.extract_strided_slice %149 {offsets = [1, 0], sizes = [1, 16], strides = [1, 1]} : vector<3x16xf32> to vector<1x16xf32>
    %153 = vector.extract_strided_slice %149 {offsets = [0, 0], sizes = [1, 16], strides = [1, 1]} : vector<3x16xf32> to vector<1x16xf32>
    %154 = tpu.concatenate %150, %151, %149, %152, %153 in 0 : vector<1x16xf32>, vector<1x16xf32>, vector<3x16xf32>, vector<1x16xf32>, vector<1x16xf32> -> vector<7x16xf32>
    %155 = vector.extract_strided_slice %154 {offsets = [0, 0], sizes = [1, 16], strides = [1, 1]} : vector<7x16xf32> to vector<1x16xf32>
    %156 = vector.extract_strided_slice %154 {offsets = [1, 0], sizes = [1, 16], strides = [1, 1]} : vector<7x16xf32> to vector<1x16xf32>
    %157 = vector.extract_strided_slice %154 {offsets = [2, 0], sizes = [1, 16], strides = [1, 1]} : vector<7x16xf32> to vector<1x16xf32>
    %158 = vector.extract_strided_slice %154 {offsets = [3, 0], sizes = [1, 16], strides = [1, 1]} : vector<7x16xf32> to vector<1x16xf32>
    %159 = vector.extract_strided_slice %154 {offsets = [4, 0], sizes = [1, 16], strides = [1, 1]} : vector<7x16xf32> to vector<1x16xf32>
    %160 = vector.extract_strided_slice %154 {offsets = [5, 0], sizes = [1, 16], strides = [1, 1]} : vector<7x16xf32> to vector<1x16xf32>
    %161 = vector.extract_strided_slice %154 {offsets = [6, 0], sizes = [1, 16], strides = [1, 1]} : vector<7x16xf32> to vector<1x16xf32>
    %162 = tpu.concatenate %155, %156, %157, %158, %159, %160, %161 in 1 : vector<1x16xf32>, vector<1x16xf32>, vector<1x16xf32>, vector<1x16xf32>, vector<1x16xf32>, vector<1x16xf32>, vector<1x16xf32> -> vector<1x112xf32>
    %163 = arith.truncf %162 : vector<1x112xf32> to vector<1x112xbf16>
    %c0_22 = arith.constant 0 : index
    %c0_23 = arith.constant 0 : index
    %164 = vector.load %arg8[%c0_22, %c0_23] : memref<112x8xbf16, #tpu.memory_space<vmem>>, vector<112x8xbf16>
    %cst_24 = arith.constant dense<0.000000e+00> : vector<1x8xf32>
    %165 = tpu.matmul %163, %164, %cst_24 {dimension_numbers = #tpu.dot_dimension_numbers<[1], [0], [0], [1], [0, 0, 1, 1], [], []>} : vector<1x112xbf16>, vector<112x8xbf16>, vector<1x8xf32> -> vector<1x8xf32>
    %c0_25 = arith.constant 0 : index
    %c0_26 = arith.constant 0 : index
    %166 = vector.load %arg9[%c0_25, %c0_26] : memref<1x8xf32, #tpu.memory_space<vmem>>, vector<1x8xf32>
    %167 = arith.addf %165, %166 : vector<1x8xf32>
    %cst_27 = arith.constant 0.000000e+00 : f32
    %168 = vector.broadcast %cst_27 : f32 to vector<1x8xf32>
    %169 = arith.cmpf oge, %167, %168 : vector<1x8xf32>
    %cst_28 = arith.constant 2.000000e-01 : f32
    %170 = vector.broadcast %cst_28 : f32 to vector<1x8xf32>
    %171 = arith.mulf %170, %167 : vector<1x8xf32>
    %172 = arith.select %169, %167, %171 : vector<1x8xi1>, vector<1x8xf32>
    %173 = vector.shape_cast %172 : vector<1x8xf32> to vector<1x8xf32>
    %174 = vector.broadcast %173 : vector<1x8xf32> to vector<2x8xf32>
    %175 = tpu.concatenate %103, %174 in 1 : vector<2x24xf32>, vector<2x8xf32> -> vector<2x32xf32>
    %176 = vector.extract_strided_slice %175 {offsets = [0, 0], sizes = [1, 32], strides = [1, 1]} : vector<2x32xf32> to vector<1x32xf32>
    %177 = vector.extract_strided_slice %175 {offsets = [1, 0], sizes = [1, 32], strides = [1, 1]} : vector<2x32xf32> to vector<1x32xf32>
    %178 = tpu.concatenate %176, %176, %177, %177 in 0 : vector<1x32xf32>, vector<1x32xf32>, vector<1x32xf32>, vector<1x32xf32> -> vector<4x32xf32>
    %179 = vector.extract_strided_slice %178 {offsets = [3, 0], sizes = [1, 32], strides = [1, 1]} : vector<4x32xf32> to vector<1x32xf32>
    %180 = vector.extract_strided_slice %178 {offsets = [2, 0], sizes = [1, 32], strides = [1, 1]} : vector<4x32xf32> to vector<1x32xf32>
    %181 = vector.extract_strided_slice %178 {offsets = [1, 0], sizes = [1, 32], strides = [1, 1]} : vector<4x32xf32> to vector<1x32xf32>
    %182 = vector.extract_strided_slice %178 {offsets = [2, 0], sizes = [1, 32], strides = [1, 1]} : vector<4x32xf32> to vector<1x32xf32>
    %183 = vector.extract_strided_slice %178 {offsets = [1, 0], sizes = [1, 32], strides = [1, 1]} : vector<4x32xf32> to vector<1x32xf32>
    %184 = vector.extract_strided_slice %178 {offsets = [0, 0], sizes = [1, 32], strides = [1, 1]} : vector<4x32xf32> to vector<1x32xf32>
    %185 = tpu.concatenate %179, %180, %181, %178, %182, %183, %184 in 0 : vector<1x32xf32>, vector<1x32xf32>, vector<1x32xf32>, vector<4x32xf32>, vector<1x32xf32>, vector<1x32xf32>, vector<1x32xf32> -> vector<10x32xf32>
    %186 = vector.extract_strided_slice %185 {offsets = [0, 0], sizes = [4, 32], strides = [1, 1]} : vector<10x32xf32> to vector<4x32xf32>
    %187 = vector.extract_strided_slice %185 {offsets = [1, 0], sizes = [4, 32], strides = [1, 1]} : vector<10x32xf32> to vector<4x32xf32>
    %188 = vector.extract_strided_slice %185 {offsets = [2, 0], sizes = [4, 32], strides = [1, 1]} : vector<10x32xf32> to vector<4x32xf32>
    %189 = vector.extract_strided_slice %185 {offsets = [3, 0], sizes = [4, 32], strides = [1, 1]} : vector<10x32xf32> to vector<4x32xf32>
    %190 = vector.extract_strided_slice %185 {offsets = [4, 0], sizes = [4, 32], strides = [1, 1]} : vector<10x32xf32> to vector<4x32xf32>
    %191 = vector.extract_strided_slice %185 {offsets = [5, 0], sizes = [4, 32], strides = [1, 1]} : vector<10x32xf32> to vector<4x32xf32>
    %192 = vector.extract_strided_slice %185 {offsets = [6, 0], sizes = [4, 32], strides = [1, 1]} : vector<10x32xf32> to vector<4x32xf32>
    %193 = tpu.concatenate %186, %187, %188, %189, %190, %191, %192 in 1 : vector<4x32xf32>, vector<4x32xf32>, vector<4x32xf32>, vector<4x32xf32>, vector<4x32xf32>, vector<4x32xf32>, vector<4x32xf32> -> vector<4x224xf32>
    %194 = arith.truncf %193 : vector<4x224xf32> to vector<4x224xbf16>
    %c0_29 = arith.constant 0 : index
    %c0_30 = arith.constant 0 : index
    %195 = vector.load %arg10[%c0_29, %c0_30] : memref<224x16xbf16, #tpu.memory_space<vmem>>, vector<224x16xbf16>
    %cst_31 = arith.constant dense<0.000000e+00> : vector<4x16xf32>
    %196 = tpu.matmul %194, %195, %cst_31 {dimension_numbers = #tpu.dot_dimension_numbers<[1], [0], [0], [1], [0, 0, 1, 1], [], []>} : vector<4x224xbf16>, vector<224x16xbf16>, vector<4x16xf32> -> vector<4x16xf32>
    %c0_32 = arith.constant 0 : index
    %c0_33 = arith.constant 0 : index
    %197 = vector.load %arg11[%c0_32, %c0_33] : memref<1x16xf32, #tpu.memory_space<vmem>>, vector<1x16xf32>
    %198 = vector.broadcast %197 : vector<1x16xf32> to vector<4x16xf32>
    %199 = arith.addf %196, %198 : vector<4x16xf32>
    %cst_34 = arith.constant 0.000000e+00 : f32
    %200 = vector.broadcast %cst_34 : f32 to vector<4x16xf32>
    %201 = arith.cmpf oge, %199, %200 : vector<4x16xf32>
    %cst_35 = arith.constant 2.000000e-01 : f32
    %202 = vector.broadcast %cst_35 : f32 to vector<4x16xf32>
    %203 = arith.mulf %202, %199 : vector<4x16xf32>
    %204 = arith.select %201, %199, %203 : vector<4x16xi1>, vector<4x16xf32>
    %205 = vector.extract_strided_slice %204 {offsets = [0, 0], sizes = [1, 16], strides = [1, 1]} : vector<4x16xf32> to vector<1x16xf32>
    %206 = vector.extract_strided_slice %204 {offsets = [1, 0], sizes = [1, 16], strides = [1, 1]} : vector<4x16xf32> to vector<1x16xf32>
    %207 = vector.extract_strided_slice %204 {offsets = [2, 0], sizes = [1, 16], strides = [1, 1]} : vector<4x16xf32> to vector<1x16xf32>
    %208 = vector.extract_strided_slice %204 {offsets = [3, 0], sizes = [1, 16], strides = [1, 1]} : vector<4x16xf32> to vector<1x16xf32>
    %209 = tpu.concatenate %205, %205, %206, %206, %207, %207, %208, %208 in 0 : vector<1x16xf32>, vector<1x16xf32>, vector<1x16xf32>, vector<1x16xf32>, vector<1x16xf32>, vector<1x16xf32>, vector<1x16xf32>, vector<1x16xf32> -> vector<8x16xf32>
    %210 = vector.extract_strided_slice %209 {offsets = [3, 0], sizes = [1, 16], strides = [1, 1]} : vector<8x16xf32> to vector<1x16xf32>
    %211 = vector.extract_strided_slice %209 {offsets = [2, 0], sizes = [1, 16], strides = [1, 1]} : vector<8x16xf32> to vector<1x16xf32>
    %212 = vector.extract_strided_slice %209 {offsets = [1, 0], sizes = [1, 16], strides = [1, 1]} : vector<8x16xf32> to vector<1x16xf32>
    %213 = vector.extract_strided_slice %209 {offsets = [6, 0], sizes = [1, 16], strides = [1, 1]} : vector<8x16xf32> to vector<1x16xf32>
    %214 = vector.extract_strided_slice %209 {offsets = [5, 0], sizes = [1, 16], strides = [1, 1]} : vector<8x16xf32> to vector<1x16xf32>
    %215 = vector.extract_strided_slice %209 {offsets = [4, 0], sizes = [1, 16], strides = [1, 1]} : vector<8x16xf32> to vector<1x16xf32>
    %216 = tpu.concatenate %210, %211, %212, %209, %213, %214, %215 in 0 : vector<1x16xf32>, vector<1x16xf32>, vector<1x16xf32>, vector<8x16xf32>, vector<1x16xf32>, vector<1x16xf32>, vector<1x16xf32> -> vector<14x16xf32>
    %217 = vector.extract_strided_slice %216 {offsets = [0, 0], sizes = [8, 16], strides = [1, 1]} : vector<14x16xf32> to vector<8x16xf32>
    %218 = vector.extract_strided_slice %216 {offsets = [1, 0], sizes = [8, 16], strides = [1, 1]} : vector<14x16xf32> to vector<8x16xf32>
    %219 = vector.extract_strided_slice %216 {offsets = [2, 0], sizes = [8, 16], strides = [1, 1]} : vector<14x16xf32> to vector<8x16xf32>
    %220 = vector.extract_strided_slice %216 {offsets = [3, 0], sizes = [8, 16], strides = [1, 1]} : vector<14x16xf32> to vector<8x16xf32>
    %221 = vector.extract_strided_slice %216 {offsets = [4, 0], sizes = [8, 16], strides = [1, 1]} : vector<14x16xf32> to vector<8x16xf32>
    %222 = vector.extract_strided_slice %216 {offsets = [5, 0], sizes = [8, 16], strides = [1, 1]} : vector<14x16xf32> to vector<8x16xf32>
    %223 = vector.extract_strided_slice %216 {offsets = [6, 0], sizes = [8, 16], strides = [1, 1]} : vector<14x16xf32> to vector<8x16xf32>
    %224 = tpu.concatenate %217, %218, %219, %220, %221, %222, %223 in 1 : vector<8x16xf32>, vector<8x16xf32>, vector<8x16xf32>, vector<8x16xf32>, vector<8x16xf32>, vector<8x16xf32>, vector<8x16xf32> -> vector<8x112xf32>
    %225 = arith.truncf %224 : vector<8x112xf32> to vector<8x112xbf16>
    %c0_36 = arith.constant 0 : index
    %c0_37 = arith.constant 0 : index
    %226 = vector.load %arg12[%c0_36, %c0_37] : memref<112x6xbf16, #tpu.memory_space<vmem>>, vector<112x6xbf16>
    %cst_38 = arith.constant dense<0.000000e+00> : vector<8x6xf32>
    %227 = tpu.matmul %225, %226, %cst_38 {dimension_numbers = #tpu.dot_dimension_numbers<[1], [0], [0], [1], [0, 0, 1, 1], [], []>} : vector<8x112xbf16>, vector<112x6xbf16>, vector<8x6xf32> -> vector<8x6xf32>
    %c0_39 = arith.constant 0 : index
    %c0_40 = arith.constant 0 : index
    %228 = vector.load %arg13[%c0_39, %c0_40] : memref<1x6xf32, #tpu.memory_space<vmem>>, vector<1x6xf32>
    %229 = vector.broadcast %228 : vector<1x6xf32> to vector<8x6xf32>
    %230 = arith.addf %227, %229 : vector<8x6xf32>
    %c0_41 = arith.constant 0 : index
    %c0_42 = arith.constant 0 : index
    %c0_43 = arith.constant 0 : index
    %231 = vector.load %arg14[%c0_41, %c0_42, %c0_43] : memref<1x8x6xf32, #tpu.memory_space<vmem>>, vector<1x8x6xf32>
    %232 = vector.shape_cast %231 : vector<1x8x6xf32> to vector<8x6xf32>
    %233 = vector.shape_cast %230 : vector<8x6xf32> to vector<1x8x6xf32>
    tpu.vector_store %arg14[%c0_41, %c0_42, %c0_43], %233 {strides = array<i32>} : memref<1x8x6xf32, #tpu.memory_space<vmem>>, vector<1x8x6xf32>,
    return
  }
  func.func @transform_0(%arg0: i32) -> (i32, i32, i32) {
    %c0_i32 = arith.constant 0 : i32
    %c0_i32_0 = arith.constant 0 : i32
    %c0_i32_1 = arith.constant 0 : i32
    return %arg0, %c0_i32, %c0_i32_0 : i32, i32, i32
  }
  func.func @transform_1(%arg0: i32) -> (i32, i32) {
    %c0_i32 = arith.constant 0 : i32
    %c0_i32_0 = arith.constant 0 : i32
    %c0_i32_1 = arith.constant 0 : i32
    return %c0_i32, %c0_i32_0 : i32, i32
  }
  func.func @transform_2(%arg0: i32) -> (i32, i32) {
    %c0_i32 = arith.constant 0 : i32
    %c0_i32_0 = arith.constant 0 : i32
    %c0_i32_1 = arith.constant 0 : i32
    return %c0_i32, %c0_i32_0 : i32, i32
  }
  func.func @transform_3(%arg0: i32) -> (i32, i32) {
    %c0_i32 = arith.constant 0 : i32
    %c0_i32_0 = arith.constant 0 : i32
    %c0_i32_1 = arith.constant 0 : i32
    return %c0_i32, %c0_i32_0 : i32, i32
  }
  func.func @transform_4(%arg0: i32) -> (i32, i32) {
    %c0_i32 = arith.constant 0 : i32
    %c0_i32_0 = arith.constant 0 : i32
    %c0_i32_1 = arith.constant 0 : i32
    return %c0_i32, %c0_i32_0 : i32, i32
  }
  func.func @transform_5(%arg0: i32) -> (i32, i32) {
    %c0_i32 = arith.constant 0 : i32
    %c0_i32_0 = arith.constant 0 : i32
    %c0_i32_1 = arith.constant 0 : i32
    return %c0_i32, %c0_i32_0 : i32, i32
  }
  func.func @transform_6(%arg0: i32) -> (i32, i32) {
    %c0_i32 = arith.constant 0 : i32
    %c0_i32_0 = arith.constant 0 : i32
    %c0_i32_1 = arith.constant 0 : i32
    return %c0_i32, %c0_i32_0 : i32, i32
  }
  func.func @transform_7(%arg0: i32) -> (i32, i32) {
    %c0_i32 = arith.constant 0 : i32
    %c0_i32_0 = arith.constant 0 : i32
    %c0_i32_1 = arith.constant 0 : i32
    return %c0_i32, %c0_i32_0 : i32, i32
  }
  func.func @transform_8(%arg0: i32) -> (i32, i32) {
    %c0_i32 = arith.constant 0 : i32
    %c0_i32_0 = arith.constant 0 : i32
    %c0_i32_1 = arith.constant 0 : i32
    return %c0_i32, %c0_i32_0 : i32, i32
  }
  func.func @transform_9(%arg0: i32) -> (i32, i32) {
    %c0_i32 = arith.constant 0 : i32
    %c0_i32_0 = arith.constant 0 : i32
    %c0_i32_1 = arith.constant 0 : i32
    return %c0_i32, %c0_i32_0 : i32, i32
  }
  func.func @transform_10(%arg0: i32) -> (i32, i32) {
    %c0_i32 = arith.constant 0 : i32
    %c0_i32_0 = arith.constant 0 : i32
    %c0_i32_1 = arith.constant 0 : i32
    return %c0_i32, %c0_i32_0 : i32, i32
  }
  func.func @transform_11(%arg0: i32) -> (i32, i32) {
    %c0_i32 = arith.constant 0 : i32
    %c0_i32_0 = arith.constant 0 : i32
    %c0_i32_1 = arith.constant 0 : i32
    return %c0_i32, %c0_i32_0 : i32, i32
  }
  func.func @transform_12(%arg0: i32) -> (i32, i32) {
    %c0_i32 = arith.constant 0 : i32
    %c0_i32_0 = arith.constant 0 : i32
    %c0_i32_1 = arith.constant 0 : i32
    return %c0_i32, %c0_i32_0 : i32, i32
  }
  func.func @transform_13(%arg0: i32) -> (i32, i32, i32) {
    %c0_i32 = arith.constant 0 : i32
    %c0_i32_0 = arith.constant 0 : i32
    %c0_i32_1 = arith.constant 0 : i32
    return %arg0, %c0_i32, %c0_i32_0 : i32, i32, i32
  }
}

</mosaic_0001>

<llo_original>
// kernel: forward.1
$region0: #{forward.1}
  #allocation0 [shape = 'u32[]', space=smem, size = 0x4, offset = 0x4, fixed_abs, tag = 'smem constant byte address 0x4 - core index']
  #allocation1 [shape = 'u32[144,128]{1,0:T(1,128)}', space=vmem, size = 0x12000, scoped, tag = 'internal scratch']
  %s0 = inlined_call_operand.vmem [shape: f32[2,8,6], index: 0, kind: input, shape index: {}]
  %s1 = inlined_call_operand.hbm [shape: bf16[48,16], index: 1, kind: input, shape index: {}]
  %s2 = inlined_call_operand.hbm [shape: f32[1,16], index: 2, kind: input, shape index: {}]
  %s3 = inlined_call_operand.vmem [shape: bf16[128,24], index: 3, kind: input, shape index: {}]
  %s4 = inlined_call_operand.hbm [shape: f32[1,24], index: 4, kind: input, shape index: {}]
  %s5 = inlined_call_operand.vmem [shape: bf16[28,16], index: 5, kind: input, shape index: {}]
  %s6 = inlined_call_operand.vmem [shape: f32[1,16], index: 6, kind: input, shape index: {}]
  %s7 = inlined_call_operand.hbm [shape: bf16[112,8], index: 7, kind: input, shape index: {}]
  %s8 = inlined_call_operand.vmem [shape: f32[1,8], index: 8, kind: input, shape index: {}]
  %s9 = inlined_call_operand.hbm [shape: bf16[224,16], index: 9, kind: input, shape index: {}]
  %s10 = inlined_call_operand.vmem [shape: f32[1,16], index: 10, kind: input, shape index: {}]
  %s11 = inlined_call_operand.hbm [shape: bf16[112,6], index: 11, kind: input, shape index: {}]
  %s12 = inlined_call_operand.vmem [shape: f32[1,6], index: 12, kind: input, shape index: {}]
  %s13 = inlined_call_operand.vmem [shape: f32[2,8,6], index: 13, kind: output, shape index: {}]
  %s14 = sld [smem:[#allocation0]]
  $region109: #{forward.1} parent=0
    _
  %s16 = ssub.s32 1, %s14
  %s17 = scalar_select 0, %s16, %s14
  $region1: #{forward.1} parent=0
    #allocation2 [shape = 'u8[12288]{0}', space=vmem, size = 0x3000, scoped, tag = 'input window, operand 1, single buffered']
    #allocation3 [shape = 's32[2]{0}', space=sflag, size = 0x8, scoped, tag = 'scoped memory for forward.1']
    #allocation4 [shape = 'u8[512]{0}', space=vmem, size = 0x400, scoped, tag = 'input window, operand 2, single buffered']
    #allocation5 [shape = 's32[1]{0}', space=sflag, size = 0x4, scoped, tag = 'scoped memory for forward.1']
    #allocation6 [shape = 'u8[512]{0}', space=vmem, size = 0x400, scoped, tag = 'input window, operand 4, single buffered']
    #allocation7 [shape = 'u8[28672]{0}', space=vmem, size = 0x7000, scoped, tag = 'input window, operand 7, single buffered']
    #allocation8 [shape = 's32[1]{0}', space=sflag, size = 0x4, scoped, tag = 'scoped memory for forward.1']
    #allocation9 [shape = 'u8[57344]{0}', space=vmem, size = 0xe000, scoped, tag = 'input window, operand 9, single buffered']
    #allocation10 [shape = 'u8[28672]{0}', space=vmem, size = 0x7000, scoped, tag = 'input window, operand 11, single buffered']
    #allocation11 [shape = 's32[1]{0}', space=sflag, size = 0x4, scoped, tag = 'scoped memory for forward.1']
    %18 = vsyncpa [#allocation3], 0
    %19 = vsyncpa [#allocation5], 0
    %20 = vsyncpa [#allocation8], 0
    %21 = vsyncpa [#allocation11], 0
    loop: start=0, step=1, limit=4
    $region2: #{forward.1} parent=1 // loop_pre_header
      _
    $region3: #{forward.1} parent=1 // loop_header
      %s23 = sphi 0, %s27
      %p24 = scmp.ge.s32.totalorder %s23, 4
      %s33 = sphi 0, %s35
      %s36 = sphi 0, %s33
      %s37 = sphi 0, %s36
      %s53 = sphi 0, %s37
      %s57 = sphi 0, %s57
      %s59 = sphi 0, %s57
      %s60 = sphi 0, %s59
      %s74 = sphi 0, %s60
      %s78 = sphi 0, %s78
      %s80 = sphi 0, %s78
      %s81 = sphi 0, %s80
      %s95 = sphi 0, %s81
      %s99 = sphi 0, %s99
      %s101 = sphi 0, %s99
      %s102 = sphi 0, %s101
      %s116 = sphi 0, %s102
      %s120 = sphi 0, %s120
      %s122 = sphi 0, %s120
      %s123 = sphi 0, %s122
      %s137 = sphi 0, %s123
      %s141 = sphi 0, %s141
      %s143 = sphi 0, %s141
      %s144 = sphi 0, %s143
      %s158 = sphi 0, %s144
      %s162 = sphi 0, %s162
      %s164 = sphi 0, %s162
      %s165 = sphi 0, %s164
      %s179 = sphi 0, %s165
      %s183 = sphi 0, %s183
      %s185 = sphi 0, %s183
      %s186 = sphi 0, %s185
      %s200 = sphi 0, %s186
      %s204 = sphi 0, %s204
      %s206 = sphi 0, %s204
      %s207 = sphi 0, %s206
      %s221 = sphi 0, %s207
      %s225 = sphi 0, %s225
      %s227 = sphi 0, %s225
      %s228 = sphi 0, %s227
      %s242 = sphi 0, %s228
      %s246 = sphi 0, %s246
      %s248 = sphi 0, %s246
      %s249 = sphi 0, %s248
      %s263 = sphi 0, %s249
      %s267 = sphi 0, %s267
      %s269 = sphi 0, %s267
      %s270 = sphi 0, %s269
      %s284 = sphi 0, %s270
      %s288 = sphi 0, %s288
      %s290 = sphi 0, %s288
      %s291 = sphi 0, %s290
      %s305 = sphi 0, %s291
      %s311 = sphi 0, %s313
      %s314 = sphi 0, %s311
      %s315 = sphi 0, %s314
      %s331 = sphi 0, %s315
    $region4: #{forward.1} parent=1 // loop_header_branch
      %26 = sbr.rel (%p24) target = $region8
    $region5: #{forward.1} parent=1 // loop_body
      %s28 = ssub.s32 %s23, 1
      %s29 = ssub.s32 %s23, 2
      %s30 = sadd.s32 %s23, 1
      %s31 = ssub.s32 %s23, %s30
      %p32 = scmp.eq.s32.totalorder %s31, 0
      %s34 = sadd.s32 %s33, 1
      %s35 = scalar_select %p32, %s33, %s34
      %p38 = pneg %p32
      %p39 = scmp.eq.s32.totalorder %s23, 1
      %p40 = por %p38, %p39
      %p41 = scmp.ne.s32.totalorder %s33, %s36
      %p42 = scmp.eq.s32.totalorder %s23, 0
      %p43 = por %p41, %p42
      %p44 = scmp.ne.s32.totalorder %s33, %s36
      %p45 = scmp.eq.s32.totalorder %s28, 1
      %p46 = por %p44, %p45
      %p47 = scmp.ne.s32.totalorder %s36, %s37
      %p48 = scmp.eq.s32.totalorder %s28, 0
      %p49 = por %p47, %p48
      %p50 = scmp.ne.s32.totalorder %s36, %s37
      %p51 = scmp.eq.s32.totalorder %s29, 1
      %p52 = por %p50, %p51
      %p54 = scmp.ne.s32.totalorder %s37, %s53
      %p55 = scmp.eq.s32.totalorder %s29, 0
      %p56 = por %p54, %p55
      %s58 = sadd.s32 %s57, 1
      %p61 = scmp.eq.s32.totalorder %s23, 1
      %p62 = scmp.ne.s32.totalorder %s57, %s59
      %p63 = scmp.eq.s32.totalorder %s23, 0
      %p64 = por %p62, %p63
      %p65 = scmp.ne.s32.totalorder %s57, %s59
      %p66 = scmp.eq.s32.totalorder %s28, 1
      %p67 = por %p65, %p66
      %p68 = scmp.ne.s32.totalorder %s59, %s60
      %p69 = scmp.eq.s32.totalorder %s28, 0
      %p70 = por %p68, %p69
      %p71 = scmp.ne.s32.totalorder %s59, %s60
      %p72 = scmp.eq.s32.totalorder %s29, 1
      %p73 = por %p71, %p72
      %p75 = scmp.ne.s32.totalorder %s60, %s74
      %p76 = scmp.eq.s32.totalorder %s29, 0
      %p77 = por %p75, %p76
      %s79 = sadd.s32 %s78, 1
      %p82 = scmp.eq.s32.totalorder %s23, 1
      %p83 = scmp.ne.s32.totalorder %s78, %s80
      %p84 = scmp.eq.s32.totalorder %s23, 0
      %p85 = por %p83, %p84
      %p86 = scmp.ne.s32.totalorder %s78, %s80
      %p87 = scmp.eq.s32.totalorder %s28, 1
      %p88 = por %p86, %p87
      %p89 = scmp.ne.s32.totalorder %s80, %s81
      %p90 = scmp.eq.s32.totalorder %s28, 0
      %p91 = por %p89, %p90
      %p92 = scmp.ne.s32.totalorder %s80, %s81
      %p93 = scmp.eq.s32.totalorder %s29, 1
      %p94 = por %p92, %p93
      %p96 = scmp.ne.s32.totalorder %s81, %s95
      %p97 = scmp.eq.s32.totalorder %s29, 0
      %p98 = por %p96, %p97
      %s100 = sadd.s32 %s99, 1
      %p103 = scmp.eq.s32.totalorder %s23, 1
      %p104 = scmp.ne.s32.totalorder %s99, %s101
      %p105 = scmp.eq.s32.totalorder %s23, 0
      %p106 = por %p104, %p105
      %p107 = scmp.ne.s32.totalorder %s99, %s101
      %p108 = scmp.eq.s32.totalorder %s28, 1
      %p109 = por %p107, %p108
      %p110 = scmp.ne.s32.totalorder %s101, %s102
      %p111 = scmp.eq.s32.totalorder %s28, 0
      %p112 = por %p110, %p111
      %p113 = scmp.ne.s32.totalorder %s101, %s102
      %p114 = scmp.eq.s32.totalorder %s29, 1
      %p115 = por %p113, %p114
      %p117 = scmp.ne.s32.totalorder %s102, %s116
      %p118 = scmp.eq.s32.totalorder %s29, 0
      %p119 = por %p117, %p118
      %s121 = sadd.s32 %s120, 1
      %p124 = scmp.eq.s32.totalorder %s23, 1
      %p125 = scmp.ne.s32.totalorder %s120, %s122
      %p126 = scmp.eq.s32.totalorder %s23, 0
      %p127 = por %p125, %p126
      %p128 = scmp.ne.s32.totalorder %s120, %s122
      %p129 = scmp.eq.s32.totalorder %s28, 1
      %p130 = por %p128, %p129
      %p131 = scmp.ne.s32.totalorder %s122, %s123
      %p132 = scmp.eq.s32.totalorder %s28, 0
      %p133 = por %p131, %p132
      %p134 = scmp.ne.s32.totalorder %s122, %s123
      %p135 = scmp.eq.s32.totalorder %s29, 1
      %p136 = por %p134, %p135
      %p138 = scmp.ne.s32.totalorder %s123, %s137
      %p139 = scmp.eq.s32.totalorder %s29, 0
      %p140 = por %p138, %p139
      %s142 = sadd.s32 %s141, 1
      %p145 = scmp.eq.s32.totalorder %s23, 1
      %p146 = scmp.ne.s32.totalorder %s141, %s143
      %p147 = scmp.eq.s32.totalorder %s23, 0
      %p148 = por %p146, %p147
      %p149 = scmp.ne.s32.totalorder %s141, %s143
      %p150 = scmp.eq.s32.totalorder %s28, 1
      %p151 = por %p149, %p150
      %p152 = scmp.ne.s32.totalorder %s143, %s144
      %p153 = scmp.eq.s32.totalorder %s28, 0
      %p154 = por %p152, %p153
      %p155 = scmp.ne.s32.totalorder %s143, %s144
      %p156 = scmp.eq.s32.totalorder %s29, 1
      %p157 = por %p155, %p156
      %p159 = scmp.ne.s32.totalorder %s144, %s158
      %p160 = scmp.eq.s32.totalorder %s29, 0
      %p161 = por %p159, %p160
      %s163 = sadd.s32 %s162, 1
      %p166 = scmp.eq.s32.totalorder %s23, 1
      %p167 = scmp.ne.s32.totalorder %s162, %s164
      %p168 = scmp.eq.s32.totalorder %s23, 0
      %p169 = por %p167, %p168
      %p170 = scmp.ne.s32.totalorder %s162, %s164
      %p171 = scmp.eq.s32.totalorder %s28, 1
      %p172 = por %p170, %p171
      %p173 = scmp.ne.s32.totalorder %s164, %s165
      %p174 = scmp.eq.s32.totalorder %s28, 0
      %p175 = por %p173, %p174
      %p176 = scmp.ne.s32.totalorder %s164, %s165
      %p177 = scmp.eq.s32.totalorder %s29, 1
      %p178 = por %p176, %p177
      %p180 = scmp.ne.s32.totalorder %s165, %s179
      %p181 = scmp.eq.s32.totalorder %s29, 0
      %p182 = por %p180, %p181
      %s184 = sadd.s32 %s183, 1
      %p187 = scmp.eq.s32.totalorder %s23, 1
      %p188 = scmp.ne.s32.totalorder %s183, %s185
      %p189 = scmp.eq.s32.totalorder %s23, 0
      %p190 = por %p188, %p189
      %p191 = scmp.ne.s32.totalorder %s183, %s185
      %p192 = scmp.eq.s32.totalorder %s28, 1
      %p193 = por %p191, %p192
      %p194 = scmp.ne.s32.totalorder %s185, %s186
      %p195 = scmp.eq.s32.totalorder %s28, 0
      %p196 = por %p194, %p195
      %p197 = scmp.ne.s32.totalorder %s185, %s186
      %p198 = scmp.eq.s32.totalorder %s29, 1
      %p199 = por %p197, %p198
      %p201 = scmp.ne.s32.totalorder %s186, %s200
      %p202 = scmp.eq.s32.totalorder %s29, 0
      %p203 = por %p201, %p202
      %s205 = sadd.s32 %s204, 1
      %p208 = scmp.eq.s32.totalorder %s23, 1
      %p209 = scmp.ne.s32.totalorder %s204, %s206
      %p210 = scmp.eq.s32.totalorder %s23, 0
      %p211 = por %p209, %p210
      %p212 = scmp.ne.s32.totalorder %s204, %s206
      %p213 = scmp.eq.s32.totalorder %s28, 1
      %p214 = por %p212, %p213
      %p215 = scmp.ne.s32.totalorder %s206, %s207
      %p216 = scmp.eq.s32.totalorder %s28, 0
      %p217 = por %p215, %p216
      %p218 = scmp.ne.s32.totalorder %s206, %s207
      %p219 = scmp.eq.s32.totalorder %s29, 1
      %p220 = por %p218, %p219
      %p222 = scmp.ne.s32.totalorder %s207, %s221
      %p223 = scmp.eq.s32.totalorder %s29, 0
      %p224 = por %p222, %p223
      %s226 = sadd.s32 %s225, 1
      %p229 = scmp.eq.s32.totalorder %s23, 1
      %p230 = scmp.ne.s32.totalorder %s225, %s227
      %p231 = scmp.eq.s32.totalorder %s23, 0
      %p232 = por %p230, %p231
      %p233 = scmp.ne.s32.totalorder %s225, %s227
      %p234 = scmp.eq.s32.totalorder %s28, 1
      %p235 = por %p233, %p234
      %p236 = scmp.ne.s32.totalorder %s227, %s228
      %p237 = scmp.eq.s32.totalorder %s28, 0
      %p238 = por %p236, %p237
      %p239 = scmp.ne.s32.totalorder %s227, %s228
      %p240 = scmp.eq.s32.totalorder %s29, 1
      %p241 = por %p239, %p240
      %p243 = scmp.ne.s32.totalorder %s228, %s242
      %p244 = scmp.eq.s32.totalorder %s29, 0
      %p245 = por %p243, %p244
      %s247 = sadd.s32 %s246, 1
      %p250 = scmp.eq.s32.totalorder %s23, 1
      %p251 = scmp.ne.s32.totalorder %s246, %s248
      %p252 = scmp.eq.s32.totalorder %s23, 0
      %p253 = por %p251, %p252
      %p254 = scmp.ne.s32.totalorder %s246, %s248
      %p255 = scmp.eq.s32.totalorder %s28, 1
      %p256 = por %p254, %p255
      %p257 = scmp.ne.s32.totalorder %s248, %s249
      %p258 = scmp.eq.s32.totalorder %s28, 0
      %p259 = por %p257, %p258
      %p260 = scmp.ne.s32.totalorder %s248, %s249
      %p261 = scmp.eq.s32.totalorder %s29, 1
      %p262 = por %p260, %p261
      %p264 = scmp.ne.s32.totalorder %s249, %s263
      %p265 = scmp.eq.s32.totalorder %s29, 0
      %p266 = por %p264, %p265
      %s268 = sadd.s32 %s267, 1
      %p271 = scmp.eq.s32.totalorder %s23, 1
      %p272 = scmp.ne.s32.totalorder %s267, %s269
      %p273 = scmp.eq.s32.totalorder %s23, 0
      %p274 = por %p272, %p273
      %p275 = scmp.ne.s32.totalorder %s267, %s269
      %p276 = scmp.eq.s32.totalorder %s28, 1
      %p277 = por %p275, %p276
      %p278 = scmp.ne.s32.totalorder %s269, %s270
      %p279 = scmp.eq.s32.totalorder %s28, 0
      %p280 = por %p278, %p279
      %p281 = scmp.ne.s32.totalorder %s269, %s270
      %p282 = scmp.eq.s32.totalorder %s29, 1
      %p283 = por %p281, %p282
      %p285 = scmp.ne.s32.totalorder %s270, %s284
      %p286 = scmp.eq.s32.totalorder %s29, 0
      %p287 = por %p285, %p286
      %s289 = sadd.s32 %s288, 1
      %p292 = scmp.eq.s32.totalorder %s23, 1
      %p293 = scmp.ne.s32.totalorder %s288, %s290
      %p294 = scmp.eq.s32.totalorder %s23, 0
      %p295 = por %p293, %p294
      %p296 = scmp.ne.s32.totalorder %s288, %s290
      %p297 = scmp.eq.s32.totalorder %s28, 1
      %p298 = por %p296, %p297
      %p299 = scmp.ne.s32.totalorder %s290, %s291
      %p300 = scmp.eq.s32.totalorder %s28, 0
      %p301 = por %p299, %p300
      %p302 = scmp.ne.s32.totalorder %s290, %s291
      %p303 = scmp.eq.s32.totalorder %s29, 1
      %p304 = por %p302, %p303
      %p306 = scmp.ne.s32.totalorder %s291, %s305
      %p307 = scmp.eq.s32.totalorder %s29, 0
      %p308 = por %p306, %p307
      %s309 = ssub.s32 %s23, %s30
      %p310 = scmp.eq.s32.totalorder %s309, 0
      %s312 = sadd.s32 %s311, 1
      %s313 = scalar_select %p310, %s311, %s312
      %p316 = pneg %p310
      %p317 = scmp.eq.s32.totalorder %s23, 1
      %p318 = por %p316, %p317
      %p319 = scmp.ne.s32.totalorder %s311, %s314
      %p320 = scmp.eq.s32.totalorder %s23, 0
      %p321 = por %p319, %p320
      %p322 = scmp.ne.s32.totalorder %s311, %s314
      %p323 = scmp.eq.s32.totalorder %s28, 1
      %p324 = por %p322, %p323
      %p325 = scmp.ne.s32.totalorder %s314, %s315
      %p326 = scmp.eq.s32.totalorder %s28, 0
      %p327 = por %p325, %p326
      %p328 = scmp.ne.s32.totalorder %s314, %s315
      %p329 = scmp.eq.s32.totalorder %s29, 1
      %p330 = por %p328, %p329
      %p332 = scmp.ne.s32.totalorder %s315, %s331
      %p333 = scmp.eq.s32.totalorder %s29, 0
      %p334 = por %p332, %p333
      %p335 = scmp.le.s32.totalorder 1, %s23
      %p336 = scmp.lt.s32.totalorder %s23, 3
      %p337 = pnand %p335, %p336
      %p338 = pneg %p337
      // Predicated region
      $region9: #{forward.1} parent=5 // pred_check
        _
      $region10: #{forward.1} parent=5 // pred_check_branch
        %340 = sbr.rel (%p337) target = $region12
      $region11: #{forward.1} parent=5 // pred_region
        %s341 = ssub.s32 %s23, 1
        // Predicated region
        $region13: #{forward.1} parent=11 // pred_check
          %p342 = pneg %p70
        $region14: #{forward.1} parent=11 // pred_check_branch
          %344 = sbr.rel (%p342) target = $region16
        $region15: #{forward.1} parent=11 // pred_region
          %s346 = ssub.s32 384, 384
          %347 = vsyncadd [#allocation3], %s346
          %s348 = sshll.u32 [#allocation2], 4
          %s349 = int_to_ptr.vmem [resolvable:$true] %s348
          %354 = dma.hbm_to_vmem [thread:$0]  %s1, 384, %s349, [#allocation3], 64, 64, 4
        $region16: #{forward.1} parent=11 // pred_fallthru
          _
        // Predicated region
        $region17: #{forward.1} parent=11 // pred_check
          %p355 = pneg %p91
        $region18: #{forward.1} parent=11 // pred_check_branch
          %357 = sbr.rel (%p355) target = $region20
        $region19: #{forward.1} parent=11 // pred_region
          %s359 = ssub.s32 16, 16
          %360 = vsyncadd [#allocation5], %s359
          %s362 = sshll.u32 [#allocation4], 4
          %s363 = int_to_ptr.vmem [resolvable:$true] %s362
          %365 = dma.hbm_to_vmem [thread:$0]  %s2, 16, %s363, [#allocation5]
        $region20: #{forward.1} parent=11 // pred_fallthru
          _
        // Predicated region
        $region21: #{forward.1} parent=11 // pred_check
          %p366 = pneg %p112
        $region22: #{forward.1} parent=11 // pred_check_branch
          %368 = sbr.rel (%p366) target = $region24
        $region23: #{forward.1} parent=11 // pred_region
          _
        $region24: #{forward.1} parent=11 // pred_fallthru
          _
        // Predicated region
        $region25: #{forward.1} parent=11 // pred_check
          %p369 = pneg %p133
        $region26: #{forward.1} parent=11 // pred_check_branch
          %371 = sbr.rel (%p369) target = $region28
        $region27: #{forward.1} parent=11 // pred_region
          %s373 = ssub.s32 16, 16
          %374 = vsyncadd [#allocation5], %s373
          %s376 = sshll.u32 [#allocation6], 4
          %s377 = int_to_ptr.vmem [resolvable:$true] %s376
          %379 = dma.hbm_to_vmem [thread:$0]  %s4, 16, %s377, [#allocation5]
        $region28: #{forward.1} parent=11 // pred_fallthru
          _
        // Predicated region
        $region29: #{forward.1} parent=11 // pred_check
          %p380 = pneg %p154
        $region30: #{forward.1} parent=11 // pred_check_branch
          %382 = sbr.rel (%p380) target = $region32
        $region31: #{forward.1} parent=11 // pred_region
          _
        $region32: #{forward.1} parent=11 // pred_fallthru
          _
        // Predicated region
        $region33: #{forward.1} parent=11 // pred_check
          %p383 = pneg %p175
        $region34: #{forward.1} parent=11 // pred_check_branch
          %385 = sbr.rel (%p383) target = $region36
        $region35: #{forward.1} parent=11 // pred_region
          _
        $region36: #{forward.1} parent=11 // pred_fallthru
          _
        // Predicated region
        $region37: #{forward.1} parent=11 // pred_check
          %p386 = pneg %p196
        $region38: #{forward.1} parent=11 // pred_check_branch
          %388 = sbr.rel (%p386) target = $region40
        $region39: #{forward.1} parent=11 // pred_region
          %s390 = ssub.s32 896, 896
          %391 = vsyncadd [#allocation8], %s390
          %s392 = sshll.u32 [#allocation7], 4
          %s393 = int_to_ptr.vmem [resolvable:$true] %s392
          %398 = dma.hbm_to_vmem [thread:$0]  %s7, 896, %s393, [#allocation8], 64, 64, 4
        $region40: #{forward.1} parent=11 // pred_fallthru
          _
        // Predicated region
        $region41: #{forward.1} parent=11 // pred_check
          %p399 = pneg %p217
        $region42: #{forward.1} parent=11 // pred_check_branch
          %401 = sbr.rel (%p399) target = $region44
        $region43: #{forward.1} parent=11 // pred_region
          _
        $region44: #{forward.1} parent=11 // pred_fallthru
          _
        // Predicated region
        $region45: #{forward.1} parent=11 // pred_check
          %p402 = pneg %p238
        $region46: #{forward.1} parent=11 // pred_check_branch
          %404 = sbr.rel (%p402) target = $region48
        $region47: #{forward.1} parent=11 // pred_region
          %s406 = ssub.s32 1792, 1792
          %407 = vsyncadd [#allocation8], %s406
          %s408 = sshll.u32 [#allocation9], 4
          %s409 = int_to_ptr.vmem [resolvable:$true] %s408
          %414 = dma.hbm_to_vmem [thread:$0]  %s9, 1792, %s409, [#allocation8], 64, 64, 4
        $region48: #{forward.1} parent=11 // pred_fallthru
          _
        // Predicated region
        $region49: #{forward.1} parent=11 // pred_check
          %p415 = pneg %p259
        $region50: #{forward.1} parent=11 // pred_check_branch
          %417 = sbr.rel (%p415) target = $region52
        $region51: #{forward.1} parent=11 // pred_region
          _
        $region52: #{forward.1} parent=11 // pred_fallthru
          _
        // Predicated region
        $region53: #{forward.1} parent=11 // pred_check
          %p418 = pneg %p280
        $region54: #{forward.1} parent=11 // pred_check_branch
          %420 = sbr.rel (%p418) target = $region56
        $region55: #{forward.1} parent=11 // pred_region
          %s422 = ssub.s32 896, 896
          %423 = vsyncadd [#allocation11], %s422
          %s424 = sshll.u32 [#allocation10], 4
          %s425 = int_to_ptr.vmem [resolvable:$true] %s424
          %430 = dma.hbm_to_vmem [thread:$0]  %s11, 896, %s425, [#allocation11], 64, 64, 4
        $region56: #{forward.1} parent=11 // pred_fallthru
          _
        // Predicated region
        $region57: #{forward.1} parent=11 // pred_check
          %p431 = pneg %p301
        $region58: #{forward.1} parent=11 // pred_check_branch
          %433 = sbr.rel (%p431) target = $region60
        $region59: #{forward.1} parent=11 // pred_region
          _
        $region60: #{forward.1} parent=11 // pred_fallthru
          _
      $region12: #{forward.1} parent=5 // pred_fallthru
        _
      %p434 = scmp.lt.s32.totalorder %s23, 2
      // Predicated region
      $region61: #{forward.1} parent=5 // pred_check
        %p435 = pneg %p434
      $region62: #{forward.1} parent=5 // pred_check_branch
        %437 = sbr.rel (%p435) target = $region64
      $region63: #{forward.1} parent=5 // pred_region
        // Predicated region
        $region65: #{forward.1} parent=63 // pred_check
          %p438 = pneg %p43
        $region66: #{forward.1} parent=63 // pred_check_branch
          %440 = sbr.rel (%p438) target = $region68
        $region67: #{forward.1} parent=63 // pred_region
          %p441 = scmp.lt.s32.totalorder %s23, 1
          %s442 = scalar_select %p441, %s23, 1
          %s443 = smul.addr %s442, 8
          %s444 = scalar_lea.vmem %s0, %s443
        $region68: #{forward.1} parent=63 // pred_fallthru
          _
      $region64: #{forward.1} parent=5 // pred_fallthru
        _
      %p445 = scmp.le.s32.totalorder 1, %s23
      %p446 = scmp.lt.s32.totalorder %s23, 3
      %p447 = pnand %p445, %p446
      %p448 = pneg %p447
      // Predicated region
      $region69: #{forward.1} parent=5 // pred_check
        _
      $region70: #{forward.1} parent=5 // pred_check_branch
        %450 = sbr.rel (%p447) target = $region72
      $region71: #{forward.1} parent=5 // pred_region
        %s451 = ssub.s32 %s23, 1
        // Predicated region
        $region73: #{forward.1} parent=71 // pred_check
          %p452 = pneg %p70
        $region74: #{forward.1} parent=71 // pred_check_branch
          %454 = sbr.rel (%p452) target = $region76
        $region75: #{forward.1} parent=71 // pred_region
          %455 = dma.done [#allocation3], 384
        $region76: #{forward.1} parent=71 // pred_fallthru
          _
        // Predicated region
        $region77: #{forward.1} parent=71 // pred_check
          %p456 = pneg %p91
        $region78: #{forward.1} parent=71 // pred_check_branch
          %458 = sbr.rel (%p456) target = $region80
        $region79: #{forward.1} parent=71 // pred_region
          %459 = dma.done [#allocation5], 16
        $region80: #{forward.1} parent=71 // pred_fallthru
          _
        // Predicated region
        $region81: #{forward.1} parent=71 // pred_check
          %p460 = pneg %p133
        $region82: #{forward.1} parent=71 // pred_check_branch
          %462 = sbr.rel (%p460) target = $region84
        $region83: #{forward.1} parent=71 // pred_region
          %463 = dma.done [#allocation5], 16
        $region84: #{forward.1} parent=71 // pred_fallthru
          _
        // Predicated region
        $region85: #{forward.1} parent=71 // pred_check
          %p464 = pneg %p196
        $region86: #{forward.1} parent=71 // pred_check_branch
          %466 = sbr.rel (%p464) target = $region88
        $region87: #{forward.1} parent=71 // pred_region
          %467 = dma.done [#allocation8], 896
        $region88: #{forward.1} parent=71 // pred_fallthru
          _
        // Predicated region
        $region89: #{forward.1} parent=71 // pred_check
          %p468 = pneg %p238
        $region90: #{forward.1} parent=71 // pred_check_branch
          %470 = sbr.rel (%p468) target = $region92
        $region91: #{forward.1} parent=71 // pred_region
          %471 = dma.done [#allocation8], 1792
        $region92: #{forward.1} parent=71 // pred_fallthru
          _
        // Predicated region
        $region93: #{forward.1} parent=71 // pred_check
          %p472 = pneg %p280
        $region94: #{forward.1} parent=71 // pred_check_branch
          %474 = sbr.rel (%p472) target = $region96
        $region95: #{forward.1} parent=71 // pred_region
          %475 = dma.done [#allocation11], 896
        $region96: #{forward.1} parent=71 // pred_fallthru
          _
        %p476 = scmp.lt.s32.totalorder %s28, 1
        %s477 = scalar_select %p476, %s28, 1
        %s478 = smul.addr %s477, 8
        %s479 = scalar_lea.vmem %s0, %s478
        %p480 = pneg %p49
        %p481 = pneg %p46
        %p482 = pneg %p70
        %p483 = pneg %p67
        %p484 = pneg %p91
        %p485 = pneg %p88
        %p486 = pneg %p112
        %p487 = pneg %p109
        %p488 = pneg %p133
        %p489 = pneg %p130
        %p490 = pneg %p154
        %p491 = pneg %p151
        %p492 = pneg %p175
        %p493 = pneg %p172
        %p494 = pneg %p196
        %p495 = pneg %p193
        %p496 = pneg %p217
        %p497 = pneg %p214
        %p498 = pneg %p238
        %p499 = pneg %p235
        %p500 = pneg %p259
        %p501 = pneg %p256
        %p502 = pneg %p280
        %p503 = pneg %p277
        %p504 = pneg %p301
        %p505 = pneg %p298
        %p506 = pneg %p327
        %p507 = pneg %p324
        %p508 = scmp.lt.s32.totalorder %s28, 1
        %s509 = scalar_select %p508, %s28, 1
        %s510 = smul.addr %s509, 8
        %s511 = scalar_lea.vmem %s13, %s510
        %p512 = scmp.lt.s32.totalorder %s28, 1
        %s513 = scalar_select %p512, %s28, 1
        %s514 = smul.addr %s513, 8
        %s515 = scalar_lea.vmem %s0, %s514
        %p516 = scmp.lt.s32.totalorder %s28, 1
        %s517 = scalar_select %p516, %s28, 1
        %s518 = smul.addr %s517, 8
        %s519 = scalar_lea.vmem %s13, %s518
        %v521 = vld [vmem:[%s515] sm:$0xff]
        %v523 = vrot.slane %v521, 3
        %v525 = vrot.slane %v521, 1
        %v527 = vrot.slane %v521, 7
        %v529 = vrot.slane %v521, 5
        %vm531 = vcmask 1040384
        %v532 = vsel %vm531, %v523, %v525
        %vm533 = vcmask 1041408
        %v534 = vsel %vm533, %v532, %v527
        %vm535 = vcmask 1042432
        %v536 = vsel %vm535, %v534, %v529
        %v537 = vsel %vm535, %v529, %v523
        %vm538 = vcmask 1043456
        %v539 = vsel %vm538, %v537, %v525
        %vm540 = vcmask 1044480
        %v541 = vsel %vm540, %v539, %v527
        %v543 = vrot.slane %v536, 1
        %v545 = vrot.slane %v536, 2
        %v547 = vrot.slane %v536, 3
        %v549 = vsel %vm531, %v536, %v543
        %v550 = vsel %vm533, %v549, %v545
        %v551 = vsel %vm535, %v550, %v547
        %v552 = vrot.slane %v536, 4
        %v554 = vsel %vm531, %v543, %v545
        %v555 = vsel %vm533, %v554, %v547
        %v556 = vsel %vm535, %v555, %v552
        %v558 = vrot.slane %v541, 5
        %v560 = vsel %vm531, %v545, %v547
        %v561 = vsel %vm533, %v560, %v552
        %v562 = vsel %vm535, %v561, %v558
        %v563 = vrot.slane %v536, 5
        %v565 = vrot.slane %v541, 6
        %v567 = vsel %vm531, %v547, %v552
        %v568 = vsel %vm533, %v567, %v563
        %v569 = vsel %vm535, %v568, %v565
        %v570 = vrot.slane %v541, 7
        %v572 = vsel %vm531, %v552, %v563
        %v573 = vsel %vm533, %v572, %v565
        %v574 = vsel %vm535, %v573, %v570
        %v575 = vrot.slane %v536, 6
        %v577 = vsel %vm531, %v563, %v575
        %v578 = vsel %vm533, %v577, %v570
        %v579 = vsel %vm535, %v578, %v541
        %v580 = vrot.slane %v541, 1
        %v582 = vsel %vm531, %v575, %v570
        %v583 = vsel %vm533, %v582, %v541
        %v584 = vsel %vm535, %v583, %v580
        %v585 = vrot.slane %v536, 7
        %v587 = vrot.slane %v541, 2
        %v589 = vsel %vm531, %v585, %v541
        %v590 = vsel %vm533, %v589, %v580
        %v591 = vsel %vm535, %v590, %v587
        %593 = vrot.lane.b32.xlu0 %v556, 6
        %v594 = vpop.permute.xlu0 %593
        %597 = vrot.lane.b32.xlu0 %v562, 12
        %v598 = vpop.permute.xlu0 %597
        %601 = vrot.lane.b32.xlu0 %v569, 18
        %v602 = vpop.permute.xlu0 %601
        %605 = vrot.lane.b32.xlu0 %v574, 24
        %v606 = vpop.permute.xlu0 %605
        %609 = vrot.lane.b32.xlu0 %v579, 30
        %v610 = vpop.permute.xlu0 %609
        %613 = vrot.lane.b32.xlu0 %v584, 36
        %v614 = vpop.permute.xlu0 %613
        %617 = vrot.lane.b32.xlu0 %v591, 42
        %v618 = vpop.permute.xlu0 %617
        %vm620 = vcmask 48128
        %v621 = vsel %vm620, %v551, %v594
        %vm622 = vcmask 97280
        %v623 = vsel %vm622, %v621, %v598
        %vm624 = vcmask 146432
        %v625 = vsel %vm624, %v623, %v602
        %vm626 = vcmask 195584
        %v627 = vsel %vm626, %v625, %v606
        %vm628 = vcmask 244736
        %v629 = vsel %vm628, %v627, %v610
        %vm630 = vcmask 293888
        %v631 = vsel %vm630, %v629, %v614
        %vm632 = vcmask 343040
        %v633 = vsel %vm632, %v631, %v618
        %v634 = vpack.c.bf16 %v633, %v633
        %v635 = vld [vmem:[#allocation2] sm:$0xf]
        %v636 = vld [vmem:[#allocation2 + $0x4] sm:$0xf]
        %v637 = vld [vmem:[#allocation2 + $0x8] sm:$0xf]
        %v638 = vld [vmem:[#allocation2 + $0xc] sm:$0xf]
        %v639 = vld [vmem:[#allocation2 + $0x10] sm:$0xf]
        %v640 = vld [vmem:[#allocation2 + $0x14] sm:$0xf]
        %v641 = vld [vmem:[#allocation4] sm:$0x1]
        %v643 = vlaneseq
        %v644 = vshrl.u32 %v643, 7
        %v645 = vsub.s32 0, %v644
        %v646 = vrot.slane %v641, %v645
        %v654 = vunpack.c.l.b16 %v635
        %v655 = vunpack.c.l.b16 %v636
        %v656 = vunpack.c.l.b16 %v637
        %v657 = vunpack.c.l.b16 %v638
        %v658 = vunpack.c.l.b16 %v639
        %v659 = vunpack.c.l.b16 %v640
        %v660 = vpack.c.b16 %v655, %v654
        %v661 = vpack.c.b16 %v657, %v656
        %v662 = vpack.c.b16 %v659, %v658
        %vm666 = vcmask 392192
        %v668 = vsel %vm666, %v634, 0
        %670 = vmatprep.subr.bf16.mxu0 0
        %671 = vmatpush1.bf16.msra.mxu0 %v660
        %672 = vmatprep.subr.bf16.mxu0 0
        %673 = vmatpush1.bf16.msra.mxu0 %v661
        %674 = vmatprep.subr.bf16.mxu0 0
        %675 = vmatpush1.bf16.msra.mxu0 %v662
        %676 = vmatprep.subr.bf16.mxu0 0
        %677 = vmatpush1.bf16.msra.mxu0 0
        %678 = vmatprep.subr.bf16.mxu0 0
        %679 = vmatpush1.bf16.msra.mxu0 0
        %680 = vmatprep.subr.bf16.mxu0 0
        %681 = vmatpush1.bf16.msra.mxu0 0
        %682 = vmatprep.subr.bf16.mxu0 0
        %683 = vmatpush1.bf16.msra.mxu0 0
        %684 = vmatprep.subr.bf16.mxu0 0
        %685 = vmatpush1.bf16.msra.mxu0 0
        %686 = vmatprep.subr.bf16.mxu0 0
        %687 = vmatpush1.bf16.msra.mxu0 0
        %688 = vmatprep.subr.bf16.mxu0 0
        %689 = vmatpush1.bf16.msra.mxu0 0
        %690 = vmatprep.subr.bf16.mxu0 0
        %691 = vmatpush1.bf16.msra.mxu0 0
        %692 = vmatprep.subr.bf16.mxu0 0
        %693 = vmatpush1.bf16.msra.mxu0 0
        %694 = vmatprep.subr.bf16.mxu0 0
        %695 = vmatpush1.bf16.msra.mxu0 0
        %696 = vmatprep.subr.bf16.mxu0 0
        %697 = vmatpush1.bf16.msra.mxu0 0
        %698 = vmatprep.subr.bf16.mxu0 0
        %699 = vmatpush1.bf16.msra.mxu0 0
        %700 = vmatprep.subr.bf16.mxu0 0
        %701 = vmatpush1.bf16.msra.mxu0 0
        %702 = vmatprep.mubr.bf16.mxu0 0
        %703 = vmatmul.mubr.bf16.gmra.mrb[0].mxu0 %v668
        %v704 = vpop.f32.mrb[0].mxu0
        %v705 = vadd.f32 %v646, %v704
        %v706 = vpop.f32.mrb[0].mxu0
        %v707 = vpop.f32.mrb[0].mxu0
        %v708 = vpop.f32.mrb[0].mxu0
        %709 = vdwg.mxu0
        %vm710 = vcmp.ge.f32.partialorder %v705, 0.0
        %v711 = vmul.f32 %v705, 0.2
        %v712 = vsel %vm710, %v705, %v711
        %v714 = vrot.slane %v712, 3
        %v716 = vrot.slane %v712, 1
        %v718 = vrot.slane %v712, 7
        %v720 = vrot.slane %v712, 5
        %v722 = vsel %vm531, %v714, %v716
        %v723 = vsel %vm533, %v722, %v718
        %v724 = vsel %vm535, %v723, %v720
        %vm725 = vcmask 1046528
        %v726 = vsel %vm725, %v724, %v714
        %v727 = vsel %vm531, %v716, %v718
        %v729 = vrot.slane %v726, 1
        %v731 = vsel %vm531, %v726, %v729
        %v732 = vrot.slane %v726, 2
        %v734 = vsel %vm531, %v729, %v732
        %v735 = vrot.slane %v726, 3
        %v737 = vsel %vm531, %v732, %v735
        %v738 = vrot.slane %v726, 4
        %v740 = vsel %vm531, %v735, %v738
        %v741 = vrot.slane %v726, 5
        %v743 = vsel %vm531, %v738, %v741
        %v744 = vrot.slane %v726, 6
        %v746 = vsel %vm531, %v741, %v744
        %v748 = vrot.slane %v727, 7
        %v750 = vsel %vm531, %v744, %v748
        %v751 = vrot.slane %v726, 7
        %v753 = vsel %vm531, %v751, %v727
        %755 = vrot.lane.b32.xlu0 %v734, 16
        %v756 = vpop.permute.xlu0 %755
        %759 = vrot.lane.b32.xlu0 %v737, 32
        %v760 = vpop.permute.xlu0 %759
        %763 = vrot.lane.b32.xlu0 %v740, 48
        %v764 = vpop.permute.xlu0 %763
        %767 = vrot.lane.b32.xlu0 %v743, 64
        %v768 = vpop.permute.xlu0 %767
        %771 = vrot.lane.b32.xlu0 %v746, 80
        %v772 = vpop.permute.xlu0 %771
        %775 = vrot.lane.b32.xlu0 %v750, 96
        %v776 = vpop.permute.xlu0 %775
        %779 = vrot.lane.b32.xlu0 %v753, 112
        %v780 = vpop.permute.xlu0 %779
        %vm782 = vcmask 130048
        %v783 = vsel %vm782, %v731, %v756
        %vm784 = vcmask 261120
        %v785 = vsel %vm784, %v783, %v760
        %v786 = vsel %vm666, %v785, %v764
        %vm787 = vcmask 523264
        %v788 = vsel %vm787, %v786, %v768
        %vm789 = vcmask 654336
        %v790 = vsel %vm789, %v788, %v772
        %vm791 = vcmask 785408
        %v792 = vsel %vm791, %v790, %v776
        %vm793 = vcmask 916480
        %v794 = vsel %vm793, %v792, %v780
        %v795 = vpack.c.bf16 %v794, %v794
        %v796 = vld [vmem:[%s3] sm:$0xf]
        %v797 = vld [vmem:[%s3 + $0x4] sm:$0xf]
        %v798 = vld [vmem:[%s3 + $0x8] sm:$0xf]
        %v799 = vld [vmem:[%s3 + $0xc] sm:$0xf]
        %v800 = vld [vmem:[%s3 + $0x10] sm:$0xf]
        %v801 = vld [vmem:[%s3 + $0x14] sm:$0xf]
        %v802 = vld [vmem:[%s3 + $0x18] sm:$0xf]
        %v803 = vld [vmem:[%s3 + $0x1c] sm:$0xf]
        %v804 = vld [vmem:[%s3 + $0x20] sm:$0xf]
        %v805 = vld [vmem:[%s3 + $0x24] sm:$0xf]
        %v806 = vld [vmem:[%s3 + $0x28] sm:$0xf]
        %v807 = vld [vmem:[%s3 + $0x2c] sm:$0xf]
        %v808 = vld [vmem:[%s3 + $0x30] sm:$0xf]
        %v809 = vld [vmem:[%s3 + $0x34] sm:$0xf]
        %v810 = vld [vmem:[%s3 + $0x38] sm:$0xf]
        %v811 = vld [vmem:[%s3 + $0x3c] sm:$0xf]
        %v812 = vld [vmem:[#allocation6] sm:$0x1]
        %v814 = vlaneseq
        %v815 = vshrl.u32 %v814, 7
        %v816 = vsub.s32 0, %v815
        %v817 = vrot.slane %v812, %v816
        %v835 = vunpack.c.l.b16 %v796
        %v836 = vunpack.c.l.b16 %v797
        %v837 = vunpack.c.l.b16 %v798
        %v838 = vunpack.c.l.b16 %v799
        %v839 = vunpack.c.l.b16 %v800
        %v840 = vunpack.c.l.b16 %v801
        %v841 = vunpack.c.l.b16 %v802
        %v842 = vunpack.c.l.b16 %v803
        %v843 = vunpack.c.l.b16 %v804
        %v844 = vunpack.c.l.b16 %v805
        %v845 = vunpack.c.l.b16 %v806
        %v846 = vunpack.c.l.b16 %v807
        %v847 = vunpack.c.l.b16 %v808
        %v848 = vunpack.c.l.b16 %v809
        %v849 = vunpack.c.l.b16 %v810
        %v850 = vunpack.c.l.b16 %v811
        %v851 = vpack.c.b16 %v836, %v835
        %v852 = vpack.c.b16 %v838, %v837
        %v853 = vpack.c.b16 %v840, %v839
        %v854 = vpack.c.b16 %v842, %v841
        %v855 = vpack.c.b16 %v844, %v843
        %v856 = vpack.c.b16 %v846, %v845
        %v857 = vpack.c.b16 %v848, %v847
        %v858 = vpack.c.b16 %v850, %v849
        %867 = vmatprep.subr.bf16.mxu0 0
        %868 = vmatpush1.bf16.msra.mxu0 %v851
        %869 = vmatprep.subr.bf16.mxu0 0
        %870 = vmatpush1.bf16.msra.mxu0 %v852
        %871 = vmatprep.subr.bf16.mxu0 0
        %872 = vmatpush1.bf16.msra.mxu0 %v853
        %873 = vmatprep.subr.bf16.mxu0 0
        %874 = vmatpush1.bf16.msra.mxu0 %v854
        %875 = vmatprep.subr.bf16.mxu0 0
        %876 = vmatpush1.bf16.msra.mxu0 %v855
        %877 = vmatprep.subr.bf16.mxu0 0
        %878 = vmatpush1.bf16.msra.mxu0 %v856
        %879 = vmatprep.subr.bf16.mxu0 0
        %880 = vmatpush1.bf16.msra.mxu0 %v857
        %881 = vmatprep.subr.bf16.mxu0 0
        %882 = vmatpush1.bf16.msra.mxu0 %v858
        %883 = vmatprep.subr.bf16.mxu0 0
        %884 = vmatpush1.bf16.msra.mxu0 0
        %885 = vmatprep.subr.bf16.mxu0 0
        %886 = vmatpush1.bf16.msra.mxu0 0
        %887 = vmatprep.subr.bf16.mxu0 0
        %888 = vmatpush1.bf16.msra.mxu0 0
        %889 = vmatprep.subr.bf16.mxu0 0
        %890 = vmatpush1.bf16.msra.mxu0 0
        %891 = vmatprep.subr.bf16.mxu0 0
        %892 = vmatpush1.bf16.msra.mxu0 0
        %893 = vmatprep.subr.bf16.mxu0 0
        %894 = vmatpush1.bf16.msra.mxu0 0
        %895 = vmatprep.subr.bf16.mxu0 0
        %896 = vmatpush1.bf16.msra.mxu0 0
        %897 = vmatprep.subr.bf16.mxu0 0
        %898 = vmatpush1.bf16.msra.mxu0 0
        %899 = vmatprep.mubr.bf16.mxu0 0
        %900 = vmatmul.mubr.bf16.gmra.mrb[0].mxu0 %v795
        %v901 = vpop.f32.mrb[0].mxu0
        %v902 = vadd.f32 %v817, %v901
        %v903 = vpop.f32.mrb[0].mxu0
        %v904 = vpop.f32.mrb[0].mxu0
        %v905 = vpop.f32.mrb[0].mxu0
        %906 = vdwg.mxu0
        %vm907 = vcmp.ge.f32.partialorder %v902, 0.0
        %v908 = vmul.f32 %v902, 0.2
        %v909 = vsel %vm907, %v902, %v908
        %v910 = vrot.slane %v521, 2
        %v912 = vrot.slane %v521, 6
        %v914 = vrot.slane %v521, 4
        %v916 = vsel %vm531, %v910, %v521
        %v917 = vsel %vm533, %v916, %v912
        %v918 = vsel %vm533, %v912, %v914
        %v919 = vsel %vm535, %v918, %v910
        %v921 = vrot.slane %v917, 1
        %v923 = vrot.slane %v917, 2
        %v925 = vsel %vm531, %v917, %v921
        %v926 = vsel %vm533, %v925, %v923
        %v927 = vrot.slane %v917, 3
        %v929 = vsel %vm531, %v921, %v923
        %v930 = vsel %vm533, %v929, %v927
        %v931 = vrot.slane %v917, 4
        %v933 = vsel %vm531, %v923, %v927
        %v934 = vsel %vm533, %v933, %v931
        %v935 = vrot.slane %v917, 5
        %v937 = vsel %vm531, %v927, %v931
        %v938 = vsel %vm533, %v937, %v935
        %v940 = vrot.slane %v919, 6
        %v942 = vsel %vm531, %v931, %v935
        %v943 = vsel %vm533, %v942, %v940
        %v944 = vrot.slane %v917, 6
        %v946 = vrot.slane %v919, 7
        %v948 = vsel %vm531, %v935, %v944
        %v949 = vsel %vm533, %v948, %v946
        %v950 = vsel %vm531, %v944, %v946
        %v951 = vsel %vm533, %v950, %v919
        %953 = vrot.lane.b32.xlu0 %v930, 4
        %v954 = vpop.permute.xlu0 %953
        %957 = vrot.lane.b32.xlu0 %v934, 8
        %v958 = vpop.permute.xlu0 %957
        %961 = vrot.lane.b32.xlu0 %v938, 12
        %v962 = vpop.permute.xlu0 %961
        %965 = vrot.lane.b32.xlu0 %v943, 16
        %v966 = vpop.permute.xlu0 %965
        %969 = vrot.lane.b32.xlu0 %v949, 20
        %v970 = vpop.permute.xlu0 %969
        %973 = vrot.lane.b32.xlu0 %v951, 24
        %v974 = vpop.permute.xlu0 %973
        %vm976 = vcmask 31744
        %v977 = vsel %vm976, %v926, %v954
        %vm978 = vcmask 64512
        %v979 = vsel %vm978, %v977, %v958
        %v980 = vsel %vm622, %v979, %v962
        %v981 = vsel %vm782, %v980, %v966
        %vm982 = vcmask 162816
        %v983 = vsel %vm982, %v981, %v970
        %v984 = vsel %vm626, %v983, %v974
        %v985 = vpack.c.bf16 %v984, %v984
        %v986 = vld [vmem:[%s5] sm:$0xf]
        %v987 = vld [vmem:[%s5 + $0x4] sm:$0xf]
        %v988 = vld [vmem:[%s5 + $0x8] sm:$0xf]
        %v989 = vld [vmem:[%s5 + $0xc] sm:$0x3]
        %v990 = vld [vmem:[%s6] sm:$0x1]
        %v992 = vlaneseq
        %v993 = vshrl.u32 %v992, 7
        %v994 = vsub.s32 0, %v993
        %v995 = vrot.slane %v990, %v994
        %v1001 = vunpack.c.l.b16 %v986
        %v1002 = vunpack.c.l.b16 %v987
        %v1003 = vunpack.c.l.b16 %v988
        %v1004 = vunpack.c.l.b16 %v989
        %v1005 = vpack.c.b16 %v1002, %v1001
        %v1006 = vpack.c.b16 %v1004, %v1003
        %vm1008 = vcmask 228352
        %v1010 = vsel %vm1008, %v985, 0
        %vm1012 = vcmask 1045504
        %v1014 = vsel %vm1012, %v1006, 0
        %1016 = vmatprep.subr.bf16.mxu0 0
        %1017 = vmatpush1.bf16.msra.mxu0 %v1005
        %1018 = vmatprep.subr.bf16.mxu0 0
        %1019 = vmatpush1.bf16.msra.mxu0 %v1014
        %1020 = vmatprep.subr.bf16.mxu0 0
        %1021 = vmatpush1.bf16.msra.mxu0 0
        %1022 = vmatprep.subr.bf16.mxu0 0
        %1023 = vmatpush1.bf16.msra.mxu0 0
        %1024 = vmatprep.subr.bf16.mxu0 0
        %1025 = vmatpush1.bf16.msra.mxu0 0
        %1026 = vmatprep.subr.bf16.mxu0 0
        %1027 = vmatpush1.bf16.msra.mxu0 0
        %1028 = vmatprep.subr.bf16.mxu0 0
        %1029 = vmatpush1.bf16.msra.mxu0 0
        %1030 = vmatprep.subr.bf16.mxu0 0
        %1031 = vmatpush1.bf16.msra.mxu0 0
        %1032 = vmatprep.subr.bf16.mxu0 0
        %1033 = vmatpush1.bf16.msra.mxu0 0
        %1034 = vmatprep.subr.bf16.mxu0 0
        %1035 = vmatpush1.bf16.msra.mxu0 0
        %1036 = vmatprep.subr.bf16.mxu0 0
        %1037 = vmatpush1.bf16.msra.mxu0 0
        %1038 = vmatprep.subr.bf16.mxu0 0
        %1039 = vmatpush1.bf16.msra.mxu0 0
        %1040 = vmatprep.subr.bf16.mxu0 0
        %1041 = vmatpush1.bf16.msra.mxu0 0
        %1042 = vmatprep.subr.bf16.mxu0 0
        %1043 = vmatpush1.bf16.msra.mxu0 0
        %1044 = vmatprep.subr.bf16.mxu0 0
        %1045 = vmatpush1.bf16.msra.mxu0 0
        %1046 = vmatprep.subr.bf16.mxu0 0
        %1047 = vmatpush1.bf16.msra.mxu0 0
        %1048 = vmatprep.mubr.bf16.mxu0 0
        %1049 = vmatmul.mubr.bf16.gmra.mrb[0].mxu0 %v1010
        %v1050 = vpop.f32.mrb[0].mxu0
        %v1051 = vadd.f32 %v995, %v1050
        %v1052 = vpop.f32.mrb[0].mxu0
        %v1053 = vpop.f32.mrb[0].mxu0
        %v1054 = vpop.f32.mrb[0].mxu0
        %1055 = vdwg.mxu0
        %vm1056 = vcmp.ge.f32.partialorder %v1051, 0.0
        %v1057 = vmul.f32 %v1051, 0.2
        %v1058 = vsel %vm1056, %v1051, %v1057
        %v1060 = vrot.slane %v1058, 2
        %v1062 = vrot.slane %v1058, 6
        %v1064 = vrot.slane %v1058, 4
        %v1066 = vsel %vm531, %v1060, %v1058
        %v1067 = vsel %vm533, %v1066, %v1062
        %v1068 = vsel %vm540, %v1067, %v1064
        %v1069 = vsel %vm1012, %v1068, %v1060
        %v1071 = vrot.slane %v1069, 1
        %1072 = vrot.lane.b32.xlu0 %v1071, 16
        %v1073 = vpop.permute.xlu0 %1072
        %v1075 = vrot.slane %v1069, 2
        %1076 = vrot.lane.b32.xlu0 %v1075, 32
        %v1077 = vpop.permute.xlu0 %1076
        %v1079 = vrot.slane %v1069, 3
        %1080 = vrot.lane.b32.xlu0 %v1079, 48
        %v1081 = vpop.permute.xlu0 %1080
        %v1083 = vrot.slane %v1069, 4
        %1084 = vrot.lane.b32.xlu0 %v1083, 64
        %v1085 = vpop.permute.xlu0 %1084
        %v1087 = vrot.slane %v1069, 5
        %1088 = vrot.lane.b32.xlu0 %v1087, 80
        %v1089 = vpop.permute.xlu0 %1088
        %v1091 = vrot.slane %v1069, 6
        %1092 = vrot.lane.b32.xlu0 %v1091, 96
        %v1093 = vpop.permute.xlu0 %1092
        %v1095 = vsel %vm782, %v1069, %v1073
        %v1096 = vsel %vm784, %v1095, %v1077
        %v1097 = vsel %vm666, %v1096, %v1081
        %v1098 = vsel %vm787, %v1097, %v1085
        %v1099 = vsel %vm789, %v1098, %v1089
        %v1100 = vsel %vm791, %v1099, %v1093
        %v1101 = vpack.c.bf16 %v1100, %v1100
        %v1102 = vld [vmem:[#allocation7] sm:$0xf]
        %v1103 = vld [vmem:[#allocation7 + $0x4] sm:$0xf]
        %v1104 = vld [vmem:[#allocation7 + $0x8] sm:$0xf]
        %v1105 = vld [vmem:[#allocation7 + $0xc] sm:$0xf]
        %v1106 = vld [vmem:[#allocation7 + $0x10] sm:$0xf]
        %v1107 = vld [vmem:[#allocation7 + $0x14] sm:$0xf]
        %v1108 = vld [vmem:[#allocation7 + $0x18] sm:$0xf]
        %v1109 = vld [vmem:[#allocation7 + $0x1c] sm:$0xf]
        %v1110 = vld [vmem:[#allocation7 + $0x20] sm:$0xf]
        %v1111 = vld [vmem:[#allocation7 + $0x24] sm:$0xf]
        %v1112 = vld [vmem:[#allocation7 + $0x28] sm:$0xf]
        %v1113 = vld [vmem:[#allocation7 + $0x2c] sm:$0xf]
        %v1114 = vld [vmem:[#allocation7 + $0x30] sm:$0xf]
        %v1115 = vld [vmem:[#allocation7 + $0x34] sm:$0xf]
        %v1116 = vld [vmem:[%s8] sm:$0x1]
        %v1131 = vunpack.c.l.b16 %v1102
        %v1132 = vunpack.c.l.b16 %v1103
        %v1133 = vunpack.c.l.b16 %v1104
        %v1134 = vunpack.c.l.b16 %v1105
        %v1135 = vunpack.c.l.b16 %v1106
        %v1136 = vunpack.c.l.b16 %v1107
        %v1137 = vunpack.c.l.b16 %v1108
        %v1138 = vunpack.c.l.b16 %v1109
        %v1139 = vunpack.c.l.b16 %v1110
        %v1140 = vunpack.c.l.b16 %v1111
        %v1141 = vunpack.c.l.b16 %v1112
        %v1142 = vunpack.c.l.b16 %v1113
        %v1143 = vunpack.c.l.b16 %v1114
        %v1144 = vunpack.c.l.b16 %v1115
        %v1145 = vpack.c.b16 %v1132, %v1131
        %v1146 = vpack.c.b16 %v1134, %v1133
        %v1147 = vpack.c.b16 %v1136, %v1135
        %v1148 = vpack.c.b16 %v1138, %v1137
        %v1149 = vpack.c.b16 %v1140, %v1139
        %v1150 = vpack.c.b16 %v1142, %v1141
        %v1151 = vpack.c.b16 %v1144, %v1143
        %v1160 = vsel %vm793, %v1101, 0
        %1162 = vmatprep.subr.bf16.mxu0 0
        %1163 = vmatpush1.bf16.msra.mxu0 %v1145
        %1164 = vmatprep.subr.bf16.mxu0 0
        %1165 = vmatpush1.bf16.msra.mxu0 %v1146
        %1166 = vmatprep.subr.bf16.mxu0 0
        %1167 = vmatpush1.bf16.msra.mxu0 %v1147
        %1168 = vmatprep.subr.bf16.mxu0 0
        %1169 = vmatpush1.bf16.msra.mxu0 %v1148
        %1170 = vmatprep.subr.bf16.mxu0 0
        %1171 = vmatpush1.bf16.msra.mxu0 %v1149
        %1172 = vmatprep.subr.bf16.mxu0 0
        %1173 = vmatpush1.bf16.msra.mxu0 %v1150
        %1174 = vmatprep.subr.bf16.mxu0 0
        %1175 = vmatpush1.bf16.msra.mxu0 %v1151
        %1176 = vmatprep.subr.bf16.mxu0 0
        %1177 = vmatpush1.bf16.msra.mxu0 0
        %1178 = vmatprep.subr.bf16.mxu0 0
        %1179 = vmatpush1.bf16.msra.mxu0 0
        %1180 = vmatprep.subr.bf16.mxu0 0
        %1181 = vmatpush1.bf16.msra.mxu0 0
        %1182 = vmatprep.subr.bf16.mxu0 0
        %1183 = vmatpush1.bf16.msra.mxu0 0
        %1184 = vmatprep.subr.bf16.mxu0 0
        %1185 = vmatpush1.bf16.msra.mxu0 0
        %1186 = vmatprep.subr.bf16.mxu0 0
        %1187 = vmatpush1.bf16.msra.mxu0 0
        %1188 = vmatprep.subr.bf16.mxu0 0
        %1189 = vmatpush1.bf16.msra.mxu0 0
        %1190 = vmatprep.subr.bf16.mxu0 0
        %1191 = vmatpush1.bf16.msra.mxu0 0
        %1192 = vmatprep.subr.bf16.mxu0 0
        %1193 = vmatpush1.bf16.msra.mxu0 0
        %1194 = vmatprep.mubr.bf16.mxu0 0
        %1195 = vmatmul.mubr.bf16.gmra.mrb[0].mxu0 %v1160
        %v1196 = vpop.f32.mrb[0].mxu0
        %v1197 = vadd.f32 %v1116, %v1196
        %v1198 = vpop.f32.mrb[0].mxu0
        %v1199 = vpop.f32.mrb[0].mxu0
        %v1200 = vpop.f32.mrb[0].mxu0
        %1201 = vdwg.mxu0
        %vm1202 = vcmp.ge.f32.partialorder %v1197, 0.0
        %v1203 = vmul.f32 %v1197, 0.2
        %v1204 = vsel %vm1202, %v1197, %v1203
        %v1205 = vlaneseq
        %v1206 = vshrl.u32 %v1205, 7
        %v1207 = vsub.s32 0, %v1206
        %v1208 = vrot.slane %v1204, %v1207
        %1210 = vrot.lane.b32.xlu0 %v1208, 24
        %v1211 = vpop.permute.xlu0 %1210
        %v1213 = vsel %vm626, %v909, %v1211
        %v1215 = vrot.slane %v1213, 7
        %v1217 = vrot.slane %v1213, 6
        %v1219 = vsel %vm531, %v1213, %v1215
        %v1220 = vsel %vm533, %v1219, %v1215
        %v1221 = vsel %vm535, %v1220, %v1217
        %v1223 = vrot.slane %v1221, 3
        %v1225 = vrot.slane %v1221, 1
        %v1227 = vrot.slane %v1221, 7
        %v1229 = vrot.slane %v1221, 5
        %v1231 = vsel %vm531, %v1223, %v1225
        %v1232 = vsel %vm533, %v1231, %v1227
        %v1233 = vsel %vm535, %v1232, %v1229
        %v1234 = vsel %vm725, %v1233, %v1223
        %v1235 = vsel %vm531, %v1225, %v1227
        %v1237 = vrot.slane %v1234, 1
        %1238 = vrot.lane.b32.xlu0 %v1237, 32
        %v1239 = vpop.permute.xlu0 %1238
        %v1241 = vrot.slane %v1234, 2
        %1242 = vrot.lane.b32.xlu0 %v1241, 64
        %v1243 = vpop.permute.xlu0 %1242
        %v1245 = vrot.slane %v1234, 3
        %1246 = vrot.lane.b32.xlu0 %v1245, 96
        %v1247 = vpop.permute.xlu0 %1246
        %v1249 = vrot.slane %v1234, 4
        %v1252 = vrot.slane %v1234, 5
        %v1253 = vrot.slane %v1235, 5
        %v1254 = vsel %vm535, %v1252, %v1253
        %1255 = vrot.lane.b32.xlu0 %v1254, 32
        %v1256 = vpop.permute.xlu0 %1255
        %v1258 = vrot.slane %v1234, 6
        %v1259 = vrot.slane %v1235, 6
        %v1260 = vsel %vm533, %v1258, %v1259
        %1261 = vrot.lane.b32.xlu0 %v1260, 64
        %v1262 = vpop.permute.xlu0 %1261
        %v1264 = vsel %vm784, %v1234, %v1239
        %v1265 = vsel %vm787, %v1264, %v1243
        %v1266 = vsel %vm791, %v1265, %v1247
        %v1267 = vsel %vm784, %v1249, %v1256
        %v1268 = vsel %vm787, %v1267, %v1262
        %v1269 = vpack.c.bf16 %v1266, %v1266
        %v1270 = vpack.c.bf16 %v1268, %v1268
        %v1271 = vld [vmem:[#allocation9] sm:$0xf]
        %v1272 = vld [vmem:[#allocation9 + $0x4] sm:$0xf]
        %v1273 = vld [vmem:[#allocation9 + $0x8] sm:$0xf]
        %v1274 = vld [vmem:[#allocation9 + $0xc] sm:$0xf]
        %v1275 = vld [vmem:[#allocation9 + $0x10] sm:$0xf]
        %v1276 = vld [vmem:[#allocation9 + $0x14] sm:$0xf]
        %v1277 = vld [vmem:[#allocation9 + $0x18] sm:$0xf]
        %v1278 = vld [vmem:[#allocation9 + $0x1c] sm:$0xf]
        %v1279 = vld [vmem:[#allocation9 + $0x20] sm:$0xf]
        %v1280 = vld [vmem:[#allocation9 + $0x24] sm:$0xf]
        %v1281 = vld [vmem:[#allocation9 + $0x28] sm:$0xf]
        %v1282 = vld [vmem:[#allocation9 + $0x2c] sm:$0xf]
        %v1283 = vld [vmem:[#allocation9 + $0x30] sm:$0xf]
        %v1284 = vld [vmem:[#allocation9 + $0x34] sm:$0xf]
        %v1285 = vld [vmem:[#allocation9 + $0x38] sm:$0xf]
        %v1286 = vld [vmem:[#allocation9 + $0x3c] sm:$0xf]
        %v1287 = vld [vmem:[#allocation9 + $0x40] sm:$0xf]
        %v1288 = vld [vmem:[#allocation9 + $0x44] sm:$0xf]
        %v1289 = vld [vmem:[#allocation9 + $0x48] sm:$0xf]
        %v1290 = vld [vmem:[#allocation9 + $0x4c] sm:$0xf]
        %v1291 = vld [vmem:[#allocation9 + $0x50] sm:$0xf]
        %v1292 = vld [vmem:[#allocation9 + $0x54] sm:$0xf]
        %v1293 = vld [vmem:[#allocation9 + $0x58] sm:$0xf]
        %v1294 = vld [vmem:[#allocation9 + $0x5c] sm:$0xf]
        %v1295 = vld [vmem:[#allocation9 + $0x60] sm:$0xf]
        %v1296 = vld [vmem:[#allocation9 + $0x64] sm:$0xf]
        %v1297 = vld [vmem:[#allocation9 + $0x68] sm:$0xf]
        %v1298 = vld [vmem:[#allocation9 + $0x6c] sm:$0xf]
        %v1299 = vld [vmem:[%s10] sm:$0x1]
        %v1301 = vlaneseq
        %v1302 = vshrl.u32 %v1301, 7
        %v1303 = vsub.s32 0, %v1302
        %v1304 = vrot.slane %v1299, %v1303
        %v1334 = vunpack.c.l.b16 %v1271
        %v1335 = vunpack.c.l.b16 %v1272
        %v1336 = vunpack.c.l.b16 %v1273
        %v1337 = vunpack.c.l.b16 %v1274
        %v1338 = vunpack.c.l.b16 %v1275
        %v1339 = vunpack.c.l.b16 %v1276
        %v1340 = vunpack.c.l.b16 %v1277
        %v1341 = vunpack.c.l.b16 %v1278
        %v1342 = vunpack.c.l.b16 %v1279
        %v1343 = vunpack.c.l.b16 %v1280
        %v1344 = vunpack.c.l.b16 %v1281
        %v1345 = vunpack.c.l.b16 %v1282
        %v1346 = vunpack.c.l.b16 %v1283
        %v1347 = vunpack.c.l.b16 %v1284
        %v1348 = vunpack.c.l.b16 %v1285
        %v1349 = vunpack.c.l.b16 %v1286
        %v1350 = vunpack.c.l.b16 %v1287
        %v1351 = vunpack.c.l.b16 %v1288
        %v1352 = vunpack.c.l.b16 %v1289
        %v1353 = vunpack.c.l.b16 %v1290
        %v1354 = vunpack.c.l.b16 %v1291
        %v1355 = vunpack.c.l.b16 %v1292
        %v1356 = vunpack.c.l.b16 %v1293
        %v1357 = vunpack.c.l.b16 %v1294
        %v1358 = vunpack.c.l.b16 %v1295
        %v1359 = vunpack.c.l.b16 %v1296
        %v1360 = vunpack.c.l.b16 %v1297
        %v1361 = vunpack.c.l.b16 %v1298
        %v1362 = vpack.c.b16 %v1335, %v1334
        %v1363 = vpack.c.b16 %v1337, %v1336
        %v1364 = vpack.c.b16 %v1339, %v1338
        %v1365 = vpack.c.b16 %v1341, %v1340
        %v1366 = vpack.c.b16 %v1343, %v1342
        %v1367 = vpack.c.b16 %v1345, %v1344
        %v1368 = vpack.c.b16 %v1347, %v1346
        %v1369 = vpack.c.b16 %v1349, %v1348
        %v1370 = vpack.c.b16 %v1351, %v1350
        %v1371 = vpack.c.b16 %v1353, %v1352
        %v1372 = vpack.c.b16 %v1355, %v1354
        %v1373 = vpack.c.b16 %v1357, %v1356
        %v1374 = vpack.c.b16 %v1359, %v1358
        %v1375 = vpack.c.b16 %v1361, %v1360
        %v1391 = vsel %vm791, %v1270, 0
        %1393 = vmatprep.subr.bf16.mxu0 0
        %1394 = vmatpush1.bf16.msra.mxu0 %v1362
        %1395 = vmatprep.subr.bf16.mxu0 0
        %1396 = vmatpush1.bf16.msra.mxu0 %v1363
        %1397 = vmatprep.subr.bf16.mxu0 0
        %1398 = vmatpush1.bf16.msra.mxu0 %v1364
        %1399 = vmatprep.subr.bf16.mxu0 0
        %1400 = vmatpush1.bf16.msra.mxu0 %v1365
        %1401 = vmatprep.subr.bf16.mxu0 0
        %1402 = vmatpush1.bf16.msra.mxu0 %v1366
        %1403 = vmatprep.subr.bf16.mxu0 0
        %1404 = vmatpush1.bf16.msra.mxu0 %v1367
        %1405 = vmatprep.subr.bf16.mxu0 0
        %1406 = vmatpush1.bf16.msra.mxu0 %v1368
        %1407 = vmatprep.subr.bf16.mxu0 0
        %1408 = vmatpush1.bf16.msra.mxu0 %v1369
        %1409 = vmatprep.subr.bf16.mxu0 0
        %1410 = vmatpush1.bf16.msra.mxu0 %v1370
        %1411 = vmatprep.subr.bf16.mxu0 0
        %1412 = vmatpush1.bf16.msra.mxu0 %v1371
        %1413 = vmatprep.subr.bf16.mxu0 0
        %1414 = vmatpush1.bf16.msra.mxu0 %v1372
        %1415 = vmatprep.subr.bf16.mxu0 0
        %1416 = vmatpush1.bf16.msra.mxu0 %v1373
        %1417 = vmatprep.subr.bf16.mxu0 0
        %1418 = vmatpush1.bf16.msra.mxu0 %v1374
        %1419 = vmatprep.subr.bf16.mxu0 0
        %1420 = vmatpush1.bf16.msra.mxu0 %v1375
        %1421 = vmatprep.subr.bf16.mxu0 0
        %1422 = vmatpush1.bf16.msra.mxu0 0
        %1423 = vmatprep.subr.bf16.mxu0 0
        %1424 = vmatpush1.bf16.msra.mxu0 0
        %1425 = vmatprep.mubr.bf16.mxu0 %v1391
        %1426 = vmatmul.mubr.bf16.gmra.mrb[0].mxu0 %v1269
        %v1427 = vpop.f32.mrb[0].mxu0
        %v1428 = vadd.f32 %v1304, %v1427
        %v1429 = vpop.f32.mrb[0].mxu0
        %v1430 = vpop.f32.mrb[0].mxu0
        %v1431 = vpop.f32.mrb[0].mxu0
        %1432 = vdwg.mxu0
        %vm1433 = vcmp.ge.f32.partialorder %v1428, 0.0
        %v1434 = vmul.f32 %v1428, 0.2
        %v1435 = vsel %vm1433, %v1428, %v1434
        %v1437 = vrot.slane %v1435, 7
        %v1439 = vrot.slane %v1435, 6
        %v1441 = vrot.slane %v1435, 5
        %v1443 = vrot.slane %v1435, 4
        %v1445 = vsel %vm531, %v1435, %v1437
        %v1446 = vsel %vm533, %v1445, %v1437
        %v1447 = vsel %vm535, %v1446, %v1439
        %v1448 = vsel %vm538, %v1447, %v1439
        %v1449 = vsel %vm540, %v1448, %v1441
        %v1450 = vsel %vm1012, %v1449, %v1441
        %v1451 = vsel %vm725, %v1450, %v1443
        %v1453 = vrot.slane %v1451, 3
        %v1455 = vrot.slane %v1451, 1
        %v1457 = vrot.slane %v1451, 7
        %v1459 = vrot.slane %v1451, 5
        %v1461 = vsel %vm531, %v1453, %v1455
        %v1462 = vsel %vm533, %v1461, %v1457
        %v1463 = vsel %vm535, %v1462, %v1459
        %v1464 = vsel %vm535, %v1459, %v1453
        %v1465 = vsel %vm538, %v1464, %v1455
        %v1466 = vsel %vm540, %v1465, %v1457
        %v1469 = vrot.slane %v1463, 1
        %v1470 = vrot.slane %v1466, 1
        %v1471 = vsel %vm725, %v1469, %v1470
        %1472 = vrot.lane.b32.xlu0 %v1471, 16
        %v1473 = vpop.permute.xlu0 %1472
        %v1475 = vrot.slane %v1463, 2
        %v1476 = vrot.slane %v1466, 2
        %v1477 = vsel %vm1012, %v1475, %v1476
        %1478 = vrot.lane.b32.xlu0 %v1477, 32
        %v1479 = vpop.permute.xlu0 %1478
        %v1481 = vrot.slane %v1463, 3
        %v1482 = vrot.slane %v1466, 3
        %v1483 = vsel %vm540, %v1481, %v1482
        %1484 = vrot.lane.b32.xlu0 %v1483, 48
        %v1485 = vpop.permute.xlu0 %1484
        %v1487 = vrot.slane %v1463, 4
        %v1488 = vrot.slane %v1466, 4
        %v1489 = vsel %vm538, %v1487, %v1488
        %1490 = vrot.lane.b32.xlu0 %v1489, 64
        %v1491 = vpop.permute.xlu0 %1490
        %v1493 = vrot.slane %v1463, 5
        %v1494 = vrot.slane %v1466, 5
        %v1495 = vsel %vm535, %v1493, %v1494
        %1496 = vrot.lane.b32.xlu0 %v1495, 80
        %v1497 = vpop.permute.xlu0 %1496
        %v1499 = vrot.slane %v1463, 6
        %v1500 = vrot.slane %v1466, 6
        %v1501 = vsel %vm533, %v1499, %v1500
        %1502 = vrot.lane.b32.xlu0 %v1501, 96
        %v1503 = vpop.permute.xlu0 %1502
        %v1505 = vsel %vm782, %v1463, %v1473
        %v1506 = vsel %vm784, %v1505, %v1479
        %v1507 = vsel %vm666, %v1506, %v1485
        %v1508 = vsel %vm787, %v1507, %v1491
        %v1509 = vsel %vm789, %v1508, %v1497
        %v1510 = vsel %vm791, %v1509, %v1503
        %v1511 = vpack.c.bf16 %v1510, %v1510
        %v1512 = vld [vmem:[#allocation10] sm:$0xf]
        %v1513 = vld [vmem:[#allocation10 + $0x4] sm:$0xf]
        %v1514 = vld [vmem:[#allocation10 + $0x8] sm:$0xf]
        %v1515 = vld [vmem:[#allocation10 + $0xc] sm:$0xf]
        %v1516 = vld [vmem:[#allocation10 + $0x10] sm:$0xf]
        %v1517 = vld [vmem:[#allocation10 + $0x14] sm:$0xf]
        %v1518 = vld [vmem:[#allocation10 + $0x18] sm:$0xf]
        %v1519 = vld [vmem:[#allocation10 + $0x1c] sm:$0xf]
        %v1520 = vld [vmem:[#allocation10 + $0x20] sm:$0xf]
        %v1521 = vld [vmem:[#allocation10 + $0x24] sm:$0xf]
        %v1522 = vld [vmem:[#allocation10 + $0x28] sm:$0xf]
        %v1523 = vld [vmem:[#allocation10 + $0x2c] sm:$0xf]
        %v1524 = vld [vmem:[#allocation10 + $0x30] sm:$0xf]
        %v1525 = vld [vmem:[#allocation10 + $0x34] sm:$0xf]
        %v1526 = vld [vmem:[%s12] sm:$0x1]
        %v1528 = vlaneseq
        %v1529 = vshrl.u32 %v1528, 7
        %v1530 = vsub.s32 0, %v1529
        %v1531 = vrot.slane %v1526, %v1530
        %v1547 = vunpack.c.l.b16 %v1512
        %v1548 = vunpack.c.l.b16 %v1513
        %v1549 = vunpack.c.l.b16 %v1514
        %v1550 = vunpack.c.l.b16 %v1515
        %v1551 = vunpack.c.l.b16 %v1516
        %v1552 = vunpack.c.l.b16 %v1517
        %v1553 = vunpack.c.l.b16 %v1518
        %v1554 = vunpack.c.l.b16 %v1519
        %v1555 = vunpack.c.l.b16 %v1520
        %v1556 = vunpack.c.l.b16 %v1521
        %v1557 = vunpack.c.l.b16 %v1522
        %v1558 = vunpack.c.l.b16 %v1523
        %v1559 = vunpack.c.l.b16 %v1524
        %v1560 = vunpack.c.l.b16 %v1525
        %v1561 = vpack.c.b16 %v1548, %v1547
        %v1562 = vpack.c.b16 %v1550, %v1549
        %v1563 = vpack.c.b16 %v1552, %v1551
        %v1564 = vpack.c.b16 %v1554, %v1553
        %v1565 = vpack.c.b16 %v1556, %v1555
        %v1566 = vpack.c.b16 %v1558, %v1557
        %v1567 = vpack.c.b16 %v1560, %v1559
        %v1576 = vsel %vm793, %v1511, 0
        %1578 = vmatprep.subr.bf16.mxu0 0
        %1579 = vmatpush1.bf16.msra.mxu0 %v1561
        %1580 = vmatprep.subr.bf16.mxu0 0
        %1581 = vmatpush1.bf16.msra.mxu0 %v1562
        %1582 = vmatprep.subr.bf16.mxu0 0
        %1583 = vmatpush1.bf16.msra.mxu0 %v1563
        %1584 = vmatprep.subr.bf16.mxu0 0
        %1585 = vmatpush1.bf16.msra.mxu0 %v1564
        %1586 = vmatprep.subr.bf16.mxu0 0
        %1587 = vmatpush1.bf16.msra.mxu0 %v1565
        %1588 = vmatprep.subr.bf16.mxu0 0
        %1589 = vmatpush1.bf16.msra.mxu0 %v1566
        %1590 = vmatprep.subr.bf16.mxu0 0
        %1591 = vmatpush1.bf16.msra.mxu0 %v1567
        %1592 = vmatprep.subr.bf16.mxu0 0
        %1593 = vmatpush1.bf16.msra.mxu0 0
        %1594 = vmatprep.subr.bf16.mxu0 0
        %1595 = vmatpush1.bf16.msra.mxu0 0
        %1596 = vmatprep.subr.bf16.mxu0 0
        %1597 = vmatpush1.bf16.msra.mxu0 0
        %1598 = vmatprep.subr.bf16.mxu0 0
        %1599 = vmatpush1.bf16.msra.mxu0 0
        %1600 = vmatprep.subr.bf16.mxu0 0
        %1601 = vmatpush1.bf16.msra.mxu0 0
        %1602 = vmatprep.subr.bf16.mxu0 0
        %1603 = vmatpush1.bf16.msra.mxu0 0
        %1604 = vmatprep.subr.bf16.mxu0 0
        %1605 = vmatpush1.bf16.msra.mxu0 0
        %1606 = vmatprep.subr.bf16.mxu0 0
        %1607 = vmatpush1.bf16.msra.mxu0 0
        %1608 = vmatprep.subr.bf16.mxu0 0
        %1609 = vmatpush1.bf16.msra.mxu0 0
        %1610 = vmatprep.mubr.bf16.mxu0 0
        %1611 = vmatmul.mubr.bf16.gmra.mrb[0].mxu0 %v1576
        %v1612 = vpop.f32.mrb[0].mxu0
        %v1613 = vadd.f32 %v1531, %v1612
        %v1614 = vpop.f32.mrb[0].mxu0
        %v1615 = vpop.f32.mrb[0].mxu0
        %v1616 = vpop.f32.mrb[0].mxu0
        %1617 = vdwg.mxu0
        %1618 = vst.msk [vmem:[%s519] sm:$0xff] %vm620, %v1613
        %p1619 = scmp.lt.s32.totalorder %s28, 1
        %s1620 = scalar_select %p1619, %s28, 1
        %s1621 = smul.addr %s1620, 8
        %s1622 = scalar_lea.vmem %s13, %s1621
        // Predicated region
        $region97: #{forward.1} parent=71 // pred_check
          %p1623 = pneg %p324
        $region98: #{forward.1} parent=71 // pred_check_branch
          %1625 = sbr.rel (%p1623) target = $region100
        $region99: #{forward.1} parent=71 // pred_region
          _
        $region100: #{forward.1} parent=71 // pred_fallthru
          _
      $region72: #{forward.1} parent=5 // pred_fallthru
        _
      %p1626 = scmp.le.s32.totalorder 2, %s23
      // Predicated region
      $region101: #{forward.1} parent=5 // pred_check
        %p1627 = pneg %p1626
      $region102: #{forward.1} parent=5 // pred_check_branch
        %1629 = sbr.rel (%p1627) target = $region104
      $region103: #{forward.1} parent=5 // pred_region
        %s1630 = ssub.s32 %s23, 2
        // Predicated region
        $region105: #{forward.1} parent=103 // pred_check
          %p1631 = pneg %p330
        $region106: #{forward.1} parent=103 // pred_check_branch
          %1633 = sbr.rel (%p1631) target = $region108
        $region107: #{forward.1} parent=103 // pred_region
          %p1634 = scmp.lt.s32.totalorder %s29, 1
          %s1635 = scalar_select %p1634, %s29, 1
          %s1636 = smul.addr %s1635, 8
          %s1637 = scalar_lea.vmem %s13, %s1636
        $region108: #{forward.1} parent=103 // pred_fallthru
          _
      $region104: #{forward.1} parent=5 // pred_fallthru
        _
    $region6: #{forward.1} parent=1 // loop_footer
      %s27 = sadd.s32 1, %s23
    $region7: #{forward.1} parent=1 // loop_footer_branch
      %22 = sbr.rel target = $region3
    $region8: #{forward.1} parent=1 // loop_exit
      _
    %1638 = vsyncpa [#allocation3], 1
    %s1639 = scalar_lea.sflag [#allocation3], 1
    %1640 = vsyncpa %s1639, 1
    %1641 = vsyncpa [#allocation5], 1
    %1642 = vsyncpa [#allocation8], 1
    %1643 = vsyncpa [#allocation11], 1

</llo_original>
